<compile_context>
chip_gen: v7x
topology: tpu7x:2x2x1
jax: 0.10.0
libtpu: 0.0.40
codegen_flags: <defaults>
</compile_context>

<pallas_src>
import functools
import math

import numpy as np
import jax
import jax.numpy as jnp
from jax import lax
from jax.experimental import pallas as pl
from jax.experimental.pallas import tpu as pltpu


# ----------------------------------------------------------------------------- #
# Gabor filter bank (deterministic, numpy port of GCN's getGaborFilterBank)
# ----------------------------------------------------------------------------- #
def gabor_filter_bank(nScale, M, h, w):
    Kmax = math.pi / 2.0
    f = math.sqrt(2.0)
    sigma = math.pi
    sqsigma = sigma ** 2
    postmean = math.exp(-sqsigma / 2.0)
    if h == 1:
        return np.ones((M, h, w), np.float32)
    g = np.zeros((M, h, w), np.float32)
    for i in range(M):
        theta = i / M * math.pi
        k = Kmax / f ** (nScale - 1)
        for y in range(h):
            for x in range(w):
                y1 = y + 1 - (h + 1) / 2.0
                x1 = x + 1 - (w + 1) / 2.0
                tmp1 = math.exp(-(k * k * (x1 * x1 + y1 * y1) / (2.0 * sqsigma)))
                tmp2 = math.cos(k * math.cos(theta) * x1 + k * math.sin(theta) * y1) - postmean
                g[i, y, x] = k * k * tmp1 * tmp2 / sqsigma
        gmin, gmax = g[i].min(), g[i].max()
        g[i] = (g[i] - gmin) / (gmax - gmin)
    return g


# ----------------------------------------------------------------------------- #
# Fused BasicBlock Pallas kernel (one grid step == one image)
# ----------------------------------------------------------------------------- #
def _basic_block_kernel(x_ref, w1_ref, w2_ref, b_ref, mask_ref, o_ref,
                        xb_ref, y1pad_ref, *, H, W, Wp, C, HWp, PAD):
    cdt = jnp.bfloat16  # MXU operand dtype; all elementwise math stays f32

    # ---- single f32 -> bf16 cast of the padded conv1 input into VMEM scratch ----
    xb_ref[...] = x_ref[0].astype(cdt)

    # ---- zero the re-pad margins of the y1 scratch (lane-aligned stores) --------
    y1pad_ref[:, :PAD] = jnp.zeros((C, PAD), cdt)
    y1pad_ref[:, PAD + HWp:2 * PAD + HWp] = jnp.zeros((C, PAD), cdt)

    # ---- conv1: 9 accumulating MXU dots, taps = static ref slices ---------------
    acc = None
    for t in range(9):
        dh, dw = divmod(t, 3)
        off = dh * Wp + dw
        tap = xb_ref[:, off:off + HWp]                       # (C, HWp) bf16
        d = jnp.dot(w1_ref[t], tap, preferred_element_type=jnp.float32)
        acc = d if acc is None else acc + d
    # folded-BN bias + ReLU, then kill the invalid (>= W) padded-width columns so
    # they act as conv2's zero border.
    y1 = jnp.maximum(acc + b_ref[0], 0.0) * mask_ref[...]
    y1pad_ref[:, PAD:PAD + HWp] = y1.astype(cdt)             # lane-aligned store

    # ---- conv2: same structure, taps read from the pre-zeroed padded scratch ----
    acc = None
    for t in range(9):
        dh, dw = divmod(t, 3)
        off = PAD + (dh - 1) * Wp + (dw - 1)
        tap = y1pad_ref[:, off:off + HWp]                    # (C, HWp) bf16
        d = jnp.dot(w2_ref[t], tap, preferred_element_type=jnp.float32)
        acc = d if acc is None else acc + d
    y2 = acc + b_ref[1]

    # ---- identity residual (downsample is None); no ReLU after the add ----------
    res = x_ref[0, :, Wp + 1:Wp + 1 + HWp]                   # f32, loaded only here
    o_ref[0] = (y2 + res).astype(o_ref.dtype)


def _round_up(v, m):
    return (v + m - 1) // m * m


def basic_block_forward(x_nchw, params):
    """x: (N, inplanes*M, H, W) NCHW like the PyTorch module.  Returns NCHW."""
    N, C, H, W = x_nchw.shape
    Cout = params["w1"].shape[0]
    assert C == Cout, "downsample is None -> identity residual requires Cin == Cout"

    # Padded width >= W+2, rounded so H*Wp is a multiple of 128 (lane-dense,
    # unmasked output stores).  Alignment is kept up to a 4x width bloat.
    step = 128 // math.gcd(H, 128)
    Wp = _round_up(W + 2, step)
    if Wp > 4 * (W + 2):
        # TODO(synk): non-128-aligned H*Wp forces masked output stores; at scale,
        #             tile the lane axis instead of taking this fallback.
        Wp = W + 2
    HWp = H * Wp
    PAD = _round_up(Wp + 1, 128)        # aligned zero margins for re-padding y1
    L = (H + 3) * Wp                    # padded/flattened conv1 input length

    # Zero-pad: 1 top row, 2 bottom rows (keeps the last tap slice in bounds),
    # 1 left col, Wp-W-1 right cols.  Flatten spatial dims.
    x = x_nchw.astype(jnp.float32)
    xpad = jnp.pad(x, ((0, 0), (0, 0), (1, 2), (1, Wp - W - 1))).reshape(N, C, L)

    def fold(w_oihw, scale):
        # OIHW -> (9, Cout, Cin), tap-major (kh, kw); BN scale folded per output
        # channel (exact, in f32), then cast to bf16 for the MXU.
        wt = jnp.transpose(w_oihw, (2, 3, 0, 1)).reshape(9, Cout, -1)
        return (wt * scale[None, :, None]).astype(jnp.bfloat16)

    w1t = fold(params["w1"], params["s1"])
    w2t = fold(params["w2"], params["s2"])
    b = jnp.stack([params["b1"], params["b2"]]).reshape(2, Cout, 1).astype(jnp.float32)

    col = jnp.arange(HWp, dtype=jnp.int32) % Wp
    mask = (col < W).astype(jnp.float32).reshape(1, HWp)     # valid-column mask

    kernel = functools.partial(_basic_block_kernel, H=H, W=W, Wp=Wp, C=C,
                               HWp=HWp, PAD=PAD)
    out = pl.pallas_call(
        kernel,
        out_shape=jax.ShapeDtypeStruct((N, Cout, HWp), jnp.float32),
        grid=(N,),
        in_specs=[
            pl.BlockSpec((1, C, L), lambda n: (n, 0, 0)),        # padded image
            pl.BlockSpec((9, Cout, C), lambda n: (0, 0, 0)),     # conv1 weights
            pl.BlockSpec((9, Cout, C), lambda n: (0, 0, 0)),     # conv2 weights
            pl.BlockSpec((2, Cout, 1), lambda n: (0, 0, 0)),     # packed biases
            pl.BlockSpec((1, HWp), lambda n: (0, 0)),            # column mask
        ],
        out_specs=pl.BlockSpec((1, Cout, HWp), lambda n: (n, 0, 0)),
        scratch_shapes=[
            pltpu.VMEM((C, L), jnp.bfloat16),                    # bf16 padded input
            pltpu.VMEM((Cout, 2 * PAD + HWp), jnp.bfloat16),     # zero-padded y1
        ],
        compiler_params=pltpu.CompilerParams(
            dimension_semantics=("parallel",)),
    )(xpad, w1t, w2t, b, mask)

    # Strip the padded-width garbage columns; output is already NCHW.
    return out.reshape(N, Cout, H, Wp)[:, :, :, :W]


# ----------------------------------------------------------------------------- #
# Parameter construction (modeled GConv weights + folded inference-mode BN)
# ----------------------------------------------------------------------------- #
def init_params(key, inplanes, planes, nChannel, nScale):
    M = nChannel
    Cin = inplanes * M
    Cmid = planes * M
    eps = 1e-5
    gb = jnp.asarray(gabor_filter_bank(nScale, M, 3, 3))  # (M, 3, 3)

    def gconv_weight(k, cin, out_planes):
        base = jax.random.normal(k, (out_planes, M, cin, 3, 3), jnp.float32)
        base = base * (1.0 / math.sqrt(cin * 9))
        w = base * gb[None, :, None, :, :]                 # modulate per orientation
        return w.reshape(out_planes * M, cin, 3, 3)        # OIHW

    def bn_fold(k, c):
        ka, kb, kc, kd = jax.random.split(k, 4)
        gamma = 1.0 + 0.1 * jax.random.normal(ka, (c,), jnp.float32)
        beta = 0.1 * jax.random.normal(kb, (c,), jnp.float32)
        mean = 0.1 * jax.random.normal(kc, (c,), jnp.float32)
        var = jnp.abs(jax.random.normal(kd, (c,), jnp.float32)) + 0.5
        s = gamma / jnp.sqrt(var + eps)
        b = beta - mean * s
        return s, b

    k1, k2, k3, k4 = jax.random.split(key, 4)
    w1 = gconv_weight(k1, Cin, planes)    # (Cmid, Cin, 3, 3)
    w2 = gconv_weight(k2, Cmid, planes)   # (Cmid, Cmid, 3, 3)
    s1, b1 = bn_fold(k3, Cmid)
    s2, b2 = bn_fold(k4, Cmid)
    return dict(w1=w1, w2=w2, s1=s1, b1=b1, s2=s2, b2=b2)


# ----------------------------------------------------------------------------- #
# Pure-JAX reference (for correctness check)
# BN is folded exactly (f32); conv operands are cast to bf16 with f32 accumulation
# to mirror the kernel's MXU dtype, so the comparison validates the structure tightly.
# ----------------------------------------------------------------------------- #
def reference_forward(x_nchw, params):
    def conv(x, w_scaled):
        return lax.conv_general_dilated(
            x.astype(jnp.bfloat16), w_scaled.astype(jnp.bfloat16),
            window_strides=(1, 1), padding=((1, 1), (1, 1)),
            dimension_numbers=("NCHW", "OIHW", "NCHW"),
            preferred_element_type=jnp.float32)

    x = x_nchw.astype(jnp.float32)
    w1s = params["w1"] * params["s1"][:, None, None, None]
    w2s = params["w2"] * params["s2"][:, None, None, None]
    y1 = jnp.maximum(conv(x, w1s) + params["b1"][None, :, None, None], 0.0)
    y2 = conv(y1, w2s) + params["b2"][None, :, None, None]
    return y2 + x     # BasicBlock.forward has no ReLU after the residual add


# ----------------------------------------------------------------------------- #
if __name__ == "__main__":
    # BasicBlock(inplanes=4, planes=4, nChannel=4, nScale=3, stride=1, pad=1,
    #            downsample=None, dilation=1)  -> feature channels = 4*4 = 16
    inplanes, planes, nChannel, nScale = 4, 4, 4, 3
    N, H, W = 2, 16, 16
    Cin = inplanes * nChannel  # 16

    key = jax.random.PRNGKey(0)
    kx, kp = jax.random.split(key)
    x = jax.random.normal(kx, (N, Cin, H, W), jnp.float32)  # NCHW, like PyTorch
    params = init_params(kp, inplanes, planes, nChannel, nScale)

    out = jax.jit(basic_block_forward)(x, params)
    out = jax.block_until_ready(out)
    assert out.shape == (N, planes * nChannel, H, W)

    ref = reference_forward(x, params)
    np.testing.assert_allclose(np.asarray(out), np.asarray(ref), rtol=5e-3, atol=5e-3)

    print("KERNEL_OK")
</pallas_src>

<mosaic_0001>
module attributes {stable_mosaic.version = 11 : i64} {
  func.func @_basic_block_kernel(%arg0: i32, %arg1: memref<1x16x456xf32, #tpu.memory_space<vmem>>, %arg2: memref<9x16x16xbf16, #tpu.memory_space<vmem>>, %arg3: memref<9x16x16xbf16, #tpu.memory_space<vmem>>, %arg4: memref<2x16x1xf32, #tpu.memory_space<vmem>>, %arg5: memref<1x384xf32, #tpu.memory_space<vmem>>, %arg6: memref<1x16x384xf32, #tpu.memory_space<vmem>>, %arg7: memref<16x456xbf16, #tpu.memory_space<vmem>>, %arg8: memref<16x640xbf16, #tpu.memory_space<vmem>>) attributes {dimension_semantics = [#tpu.dimension_semantics<parallel>], iteration_bounds = array<i64: 2>, scalar_prefetch = 0 : i64, scratch_operands = 2 : i64, tpu.core_type = #tpu.core_type<tc>, window_params = [{transform_indices = @transform_0, window_bounds = array<i64: 1, 16, 456>}, {pipeline_mode = #tpu.pipeline_mode<synchronous>, transform_indices = @transform_1, window_bounds = array<i64: 9, 16, 16>}, {pipeline_mode = #tpu.pipeline_mode<synchronous>, transform_indices = @transform_2, window_bounds = array<i64: 9, 16, 16>}, {pipeline_mode = #tpu.pipeline_mode<synchronous>, transform_indices = @transform_3, window_bounds = array<i64: 2, 16, 1>}, {pipeline_mode = #tpu.pipeline_mode<synchronous>, transform_indices = @transform_4, window_bounds = array<i64: 1, 384>}, {transform_indices = @transform_5, window_bounds = array<i64: 1, 16, 384>}]} {
    %c0 = arith.constant 0 : index
    %c0_0 = arith.constant 0 : index
    %c0_1 = arith.constant 0 : index
    %0 = vector.load %arg1[%c0, %c0_0, %c0_1] : memref<1x16x456xf32, #tpu.memory_space<vmem>>, vector<1x16x456xf32>
    %1 = vector.shape_cast %0 : vector<1x16x456xf32> to vector<16x456xf32>
    %2 = arith.truncf %1 : vector<16x456xf32> to vector<16x456xbf16>
    %c0_2 = arith.constant 0 : index
    %c0_3 = arith.constant 0 : index
    %3 = vector.load %arg7[%c0_2, %c0_3] : memref<16x456xbf16, #tpu.memory_space<vmem>>, vector<16x456xbf16>
    tpu.vector_store %arg7[%c0_2, %c0_3], %2 {strides = array<i32>} : memref<16x456xbf16, #tpu.memory_space<vmem>>, vector<16x456xbf16>,
    %cst = arith.constant 0.000000e+00 : bf16
    %4 = vector.broadcast %cst : bf16 to vector<16x128xbf16>
    %c0_4 = arith.constant 0 : index
    %c0_5 = arith.constant 0 : index
    %5 = vector.load %arg8[%c0_4, %c0_5] : memref<16x640xbf16, #tpu.memory_space<vmem>>, vector<16x128xbf16>
    tpu.vector_store %arg8[%c0_4, %c0_5], %4 {strides = array<i32>} : memref<16x640xbf16, #tpu.memory_space<vmem>>, vector<16x128xbf16>,
    %cst_6 = arith.constant 0.000000e+00 : bf16
    %6 = vector.broadcast %cst_6 : bf16 to vector<16x128xbf16>
    %c0_7 = arith.constant 0 : index
    %c512 = arith.constant 512 : index
    %7 = vector.load %arg8[%c0_7, %c512] : memref<16x640xbf16, #tpu.memory_space<vmem>>, vector<16x128xbf16>
    tpu.vector_store %arg8[%c0_7, %c512], %6 {strides = array<i32>} : memref<16x640xbf16, #tpu.memory_space<vmem>>, vector<16x128xbf16>,
    %c0_8 = arith.constant 0 : index
    %c0_9 = arith.constant 0 : index
    %8 = vector.load %arg7[%c0_8, %c0_9] : memref<16x456xbf16, #tpu.memory_space<vmem>>, vector<16x384xbf16>
    %c0_10 = arith.constant 0 : index
    %c0_11 = arith.constant 0 : index
    %c0_12 = arith.constant 0 : index
    %9 = vector.load %arg2[%c0_10, %c0_11, %c0_12] : memref<9x16x16xbf16, #tpu.memory_space<vmem>>, vector<1x16x16xbf16>
    %10 = vector.shape_cast %9 : vector<1x16x16xbf16> to vector<16x16xbf16>
    %cst_13 = arith.constant dense<0.000000e+00> : vector<16x384xf32>
    %11 = tpu.matmul %10, %8, %cst_13 {dimension_numbers = #tpu.dot_dimension_numbers<[1], [0], [0], [1], [0, 0, 1, 1], [], []>} : vector<16x16xbf16>, vector<16x384xbf16>, vector<16x384xf32> -> vector<16x384xf32>
    %c0_14 = arith.constant 0 : index
    %c1 = arith.constant 1 : index
    %12 = vector.load %arg7[%c0_14, %c1] : memref<16x456xbf16, #tpu.memory_space<vmem>>, vector<16x384xbf16>
    %c1_15 = arith.constant 1 : index
    %c0_16 = arith.constant 0 : index
    %c0_17 = arith.constant 0 : index
    %13 = vector.load %arg2[%c1_15, %c0_16, %c0_17] : memref<9x16x16xbf16, #tpu.memory_space<vmem>>, vector<1x16x16xbf16>
    %14 = vector.shape_cast %13 : vector<1x16x16xbf16> to vector<16x16xbf16>
    %cst_18 = arith.constant dense<0.000000e+00> : vector<16x384xf32>
    %15 = tpu.matmul %14, %12, %cst_18 {dimension_numbers = #tpu.dot_dimension_numbers<[1], [0], [0], [1], [0, 0, 1, 1], [], []>} : vector<16x16xbf16>, vector<16x384xbf16>, vector<16x384xf32> -> vector<16x384xf32>
    %16 = arith.addf %11, %15 : vector<16x384xf32>
    %c0_19 = arith.constant 0 : index
    %c2 = arith.constant 2 : index
    %17 = vector.load %arg7[%c0_19, %c2] : memref<16x456xbf16, #tpu.memory_space<vmem>>, vector<16x384xbf16>
    %c2_20 = arith.constant 2 : index
    %c0_21 = arith.constant 0 : index
    %c0_22 = arith.constant 0 : index
    %18 = vector.load %arg2[%c2_20, %c0_21, %c0_22] : memref<9x16x16xbf16, #tpu.memory_space<vmem>>, vector<1x16x16xbf16>
    %19 = vector.shape_cast %18 : vector<1x16x16xbf16> to vector<16x16xbf16>
    %cst_23 = arith.constant dense<0.000000e+00> : vector<16x384xf32>
    %20 = tpu.matmul %19, %17, %cst_23 {dimension_numbers = #tpu.dot_dimension_numbers<[1], [0], [0], [1], [0, 0, 1, 1], [], []>} : vector<16x16xbf16>, vector<16x384xbf16>, vector<16x384xf32> -> vector<16x384xf32>
    %21 = arith.addf %16, %20 : vector<16x384xf32>
    %c0_24 = arith.constant 0 : index
    %c24 = arith.constant 24 : index
    %22 = vector.load %arg7[%c0_24, %c24] : memref<16x456xbf16, #tpu.memory_space<vmem>>, vector<16x384xbf16>
    %c3 = arith.constant 3 : index
    %c0_25 = arith.constant 0 : index
    %c0_26 = arith.constant 0 : index
    %23 = vector.load %arg2[%c3, %c0_25, %c0_26] : memref<9x16x16xbf16, #tpu.memory_space<vmem>>, vector<1x16x16xbf16>
    %24 = vector.shape_cast %23 : vector<1x16x16xbf16> to vector<16x16xbf16>
    %cst_27 = arith.constant dense<0.000000e+00> : vector<16x384xf32>
    %25 = tpu.matmul %24, %22, %cst_27 {dimension_numbers = #tpu.dot_dimension_numbers<[1], [0], [0], [1], [0, 0, 1, 1], [], []>} : vector<16x16xbf16>, vector<16x384xbf16>, vector<16x384xf32> -> vector<16x384xf32>
    %26 = arith.addf %21, %25 : vector<16x384xf32>
    %c0_28 = arith.constant 0 : index
    %c25 = arith.constant 25 : index
    %27 = vector.load %arg7[%c0_28, %c25] : memref<16x456xbf16, #tpu.memory_space<vmem>>, vector<16x384xbf16>
    %c4 = arith.constant 4 : index
    %c0_29 = arith.constant 0 : index
    %c0_30 = arith.constant 0 : index
    %28 = vector.load %arg2[%c4, %c0_29, %c0_30] : memref<9x16x16xbf16, #tpu.memory_space<vmem>>, vector<1x16x16xbf16>
    %29 = vector.shape_cast %28 : vector<1x16x16xbf16> to vector<16x16xbf16>
    %cst_31 = arith.constant dense<0.000000e+00> : vector<16x384xf32>
    %30 = tpu.matmul %29, %27, %cst_31 {dimension_numbers = #tpu.dot_dimension_numbers<[1], [0], [0], [1], [0, 0, 1, 1], [], []>} : vector<16x16xbf16>, vector<16x384xbf16>, vector<16x384xf32> -> vector<16x384xf32>
    %31 = arith.addf %26, %30 : vector<16x384xf32>
    %c0_32 = arith.constant 0 : index
    %c26 = arith.constant 26 : index
    %32 = vector.load %arg7[%c0_32, %c26] : memref<16x456xbf16, #tpu.memory_space<vmem>>, vector<16x384xbf16>
    %c5 = arith.constant 5 : index
    %c0_33 = arith.constant 0 : index
    %c0_34 = arith.constant 0 : index
    %33 = vector.load %arg2[%c5, %c0_33, %c0_34] : memref<9x16x16xbf16, #tpu.memory_space<vmem>>, vector<1x16x16xbf16>
    %34 = vector.shape_cast %33 : vector<1x16x16xbf16> to vector<16x16xbf16>
    %cst_35 = arith.constant dense<0.000000e+00> : vector<16x384xf32>
    %35 = tpu.matmul %34, %32, %cst_35 {dimension_numbers = #tpu.dot_dimension_numbers<[1], [0], [0], [1], [0, 0, 1, 1], [], []>} : vector<16x16xbf16>, vector<16x384xbf16>, vector<16x384xf32> -> vector<16x384xf32>
    %36 = arith.addf %31, %35 : vector<16x384xf32>
    %c0_36 = arith.constant 0 : index
    %c48 = arith.constant 48 : index
    %37 = vector.load %arg7[%c0_36, %c48] : memref<16x456xbf16, #tpu.memory_space<vmem>>, vector<16x384xbf16>
    %c6 = arith.constant 6 : index
    %c0_37 = arith.constant 0 : index
    %c0_38 = arith.constant 0 : index
    %38 = vector.load %arg2[%c6, %c0_37, %c0_38] : memref<9x16x16xbf16, #tpu.memory_space<vmem>>, vector<1x16x16xbf16>
    %39 = vector.shape_cast %38 : vector<1x16x16xbf16> to vector<16x16xbf16>
    %cst_39 = arith.constant dense<0.000000e+00> : vector<16x384xf32>
    %40 = tpu.matmul %39, %37, %cst_39 {dimension_numbers = #tpu.dot_dimension_numbers<[1], [0], [0], [1], [0, 0, 1, 1], [], []>} : vector<16x16xbf16>, vector<16x384xbf16>, vector<16x384xf32> -> vector<16x384xf32>
    %41 = arith.addf %36, %40 : vector<16x384xf32>
    %c0_40 = arith.constant 0 : index
    %c49 = arith.constant 49 : index
    %42 = vector.load %arg7[%c0_40, %c49] : memref<16x456xbf16, #tpu.memory_space<vmem>>, vector<16x384xbf16>
    %c7 = arith.constant 7 : index
    %c0_41 = arith.constant 0 : index
    %c0_42 = arith.constant 0 : index
    %43 = vector.load %arg2[%c7, %c0_41, %c0_42] : memref<9x16x16xbf16, #tpu.memory_space<vmem>>, vector<1x16x16xbf16>
    %44 = vector.shape_cast %43 : vector<1x16x16xbf16> to vector<16x16xbf16>
    %cst_43 = arith.constant dense<0.000000e+00> : vector<16x384xf32>
    %45 = tpu.matmul %44, %42, %cst_43 {dimension_numbers = #tpu.dot_dimension_numbers<[1], [0], [0], [1], [0, 0, 1, 1], [], []>} : vector<16x16xbf16>, vector<16x384xbf16>, vector<16x384xf32> -> vector<16x384xf32>
    %46 = arith.addf %41, %45 : vector<16x384xf32>
    %c0_44 = arith.constant 0 : index
    %c50 = arith.constant 50 : index
    %47 = vector.load %arg7[%c0_44, %c50] : memref<16x456xbf16, #tpu.memory_space<vmem>>, vector<16x384xbf16>
    %c8 = arith.constant 8 : index
    %c0_45 = arith.constant 0 : index
    %c0_46 = arith.constant 0 : index
    %48 = vector.load %arg2[%c8, %c0_45, %c0_46] : memref<9x16x16xbf16, #tpu.memory_space<vmem>>, vector<1x16x16xbf16>
    %49 = vector.shape_cast %48 : vector<1x16x16xbf16> to vector<16x16xbf16>
    %cst_47 = arith.constant dense<0.000000e+00> : vector<16x384xf32>
    %50 = tpu.matmul %49, %47, %cst_47 {dimension_numbers = #tpu.dot_dimension_numbers<[1], [0], [0], [1], [0, 0, 1, 1], [], []>} : vector<16x16xbf16>, vector<16x384xbf16>, vector<16x384xf32> -> vector<16x384xf32>
    %51 = arith.addf %46, %50 : vector<16x384xf32>
    %c0_48 = arith.constant 0 : index
    %c0_49 = arith.constant 0 : index
    %c0_50 = arith.constant 0 : index
    %52 = vector.load %arg4[%c0_48, %c0_49, %c0_50] : memref<2x16x1xf32, #tpu.memory_space<vmem>>, vector<1x16x1xf32>
    %53 = vector.shape_cast %52 : vector<1x16x1xf32> to vector<16x1xf32>
    %54 = vector.broadcast %53 : vector<16x1xf32> to vector<16x384xf32>
    %55 = arith.addf %51, %54 : vector<16x384xf32>
    %cst_51 = arith.constant 0.000000e+00 : f32
    %56 = vector.broadcast %cst_51 : f32 to vector<16x384xf32>
    %57 = arith.maximumf %55, %56 : vector<16x384xf32>
    %c0_52 = arith.constant 0 : index
    %c0_53 = arith.constant 0 : index
    %58 = vector.load %arg5[%c0_52, %c0_53] : memref<1x384xf32, #tpu.memory_space<vmem>>, vector<1x384xf32>
    %59 = vector.broadcast %58 : vector<1x384xf32> to vector<16x384xf32>
    %60 = arith.mulf %57, %59 : vector<16x384xf32>
    %61 = arith.truncf %60 : vector<16x384xf32> to vector<16x384xbf16>
    %c0_54 = arith.constant 0 : index
    %c128 = arith.constant 128 : index
    %62 = vector.load %arg8[%c0_54, %c128] : memref<16x640xbf16, #tpu.memory_space<vmem>>, vector<16x384xbf16>
    tpu.vector_store %arg8[%c0_54, %c128], %61 {strides = array<i32>} : memref<16x640xbf16, #tpu.memory_space<vmem>>, vector<16x384xbf16>,
    %c0_55 = arith.constant 0 : index
    %c103 = arith.constant 103 : index
    %63 = vector.load %arg8[%c0_55, %c103] : memref<16x640xbf16, #tpu.memory_space<vmem>>, vector<16x384xbf16>
    %c0_56 = arith.constant 0 : index
    %c0_57 = arith.constant 0 : index
    %c0_58 = arith.constant 0 : index
    %64 = vector.load %arg3[%c0_56, %c0_57, %c0_58] : memref<9x16x16xbf16, #tpu.memory_space<vmem>>, vector<1x16x16xbf16>
    %65 = vector.shape_cast %64 : vector<1x16x16xbf16> to vector<16x16xbf16>
    %cst_59 = arith.constant dense<0.000000e+00> : vector<16x384xf32>
    %66 = tpu.matmul %65, %63, %cst_59 {dimension_numbers = #tpu.dot_dimension_numbers<[1], [0], [0], [1], [0, 0, 1, 1], [], []>} : vector<16x16xbf16>, vector<16x384xbf16>, vector<16x384xf32> -> vector<16x384xf32>
    %c0_60 = arith.constant 0 : index
    %c104 = arith.constant 104 : index
    %67 = vector.load %arg8[%c0_60, %c104] : memref<16x640xbf16, #tpu.memory_space<vmem>>, vector<16x384xbf16>
    %c1_61 = arith.constant 1 : index
    %c0_62 = arith.constant 0 : index
    %c0_63 = arith.constant 0 : index
    %68 = vector.load %arg3[%c1_61, %c0_62, %c0_63] : memref<9x16x16xbf16, #tpu.memory_space<vmem>>, vector<1x16x16xbf16>
    %69 = vector.shape_cast %68 : vector<1x16x16xbf16> to vector<16x16xbf16>
    %cst_64 = arith.constant dense<0.000000e+00> : vector<16x384xf32>
    %70 = tpu.matmul %69, %67, %cst_64 {dimension_numbers = #tpu.dot_dimension_numbers<[1], [0], [0], [1], [0, 0, 1, 1], [], []>} : vector<16x16xbf16>, vector<16x384xbf16>, vector<16x384xf32> -> vector<16x384xf32>
    %71 = arith.addf %66, %70 : vector<16x384xf32>
    %c0_65 = arith.constant 0 : index
    %c105 = arith.constant 105 : index
    %72 = vector.load %arg8[%c0_65, %c105] : memref<16x640xbf16, #tpu.memory_space<vmem>>, vector<16x384xbf16>
    %c2_66 = arith.constant 2 : index
    %c0_67 = arith.constant 0 : index
    %c0_68 = arith.constant 0 : index
    %73 = vector.load %arg3[%c2_66, %c0_67, %c0_68] : memref<9x16x16xbf16, #tpu.memory_space<vmem>>, vector<1x16x16xbf16>
    %74 = vector.shape_cast %73 : vector<1x16x16xbf16> to vector<16x16xbf16>
    %cst_69 = arith.constant dense<0.000000e+00> : vector<16x384xf32>
    %75 = tpu.matmul %74, %72, %cst_69 {dimension_numbers = #tpu.dot_dimension_numbers<[1], [0], [0], [1], [0, 0, 1, 1], [], []>} : vector<16x16xbf16>, vector<16x384xbf16>, vector<16x384xf32> -> vector<16x384xf32>
    %76 = arith.addf %71, %75 : vector<16x384xf32>
    %c0_70 = arith.constant 0 : index
    %c127 = arith.constant 127 : index
    %77 = vector.load %arg8[%c0_70, %c127] : memref<16x640xbf16, #tpu.memory_space<vmem>>, vector<16x384xbf16>
    %c3_71 = arith.constant 3 : index
    %c0_72 = arith.constant 0 : index
    %c0_73 = arith.constant 0 : index
    %78 = vector.load %arg3[%c3_71, %c0_72, %c0_73] : memref<9x16x16xbf16, #tpu.memory_space<vmem>>, vector<1x16x16xbf16>
    %79 = vector.shape_cast %78 : vector<1x16x16xbf16> to vector<16x16xbf16>
    %cst_74 = arith.constant dense<0.000000e+00> : vector<16x384xf32>
    %80 = tpu.matmul %79, %77, %cst_74 {dimension_numbers = #tpu.dot_dimension_numbers<[1], [0], [0], [1], [0, 0, 1, 1], [], []>} : vector<16x16xbf16>, vector<16x384xbf16>, vector<16x384xf32> -> vector<16x384xf32>
    %81 = arith.addf %76, %80 : vector<16x384xf32>
    %c0_75 = arith.constant 0 : index
    %c128_76 = arith.constant 128 : index
    %82 = vector.load %arg8[%c0_75, %c128_76] : memref<16x640xbf16, #tpu.memory_space<vmem>>, vector<16x384xbf16>
    %c4_77 = arith.constant 4 : index
    %c0_78 = arith.constant 0 : index
    %c0_79 = arith.constant 0 : index
    %83 = vector.load %arg3[%c4_77, %c0_78, %c0_79] : memref<9x16x16xbf16, #tpu.memory_space<vmem>>, vector<1x16x16xbf16>
    %84 = vector.shape_cast %83 : vector<1x16x16xbf16> to vector<16x16xbf16>
    %cst_80 = arith.constant dense<0.000000e+00> : vector<16x384xf32>
    %85 = tpu.matmul %84, %82, %cst_80 {dimension_numbers = #tpu.dot_dimension_numbers<[1], [0], [0], [1], [0, 0, 1, 1], [], []>} : vector<16x16xbf16>, vector<16x384xbf16>, vector<16x384xf32> -> vector<16x384xf32>
    %86 = arith.addf %81, %85 : vector<16x384xf32>
    %c0_81 = arith.constant 0 : index
    %c129 = arith.constant 129 : index
    %87 = vector.load %arg8[%c0_81, %c129] : memref<16x640xbf16, #tpu.memory_space<vmem>>, vector<16x384xbf16>
    %c5_82 = arith.constant 5 : index
    %c0_83 = arith.constant 0 : index
    %c0_84 = arith.constant 0 : index
    %88 = vector.load %arg3[%c5_82, %c0_83, %c0_84] : memref<9x16x16xbf16, #tpu.memory_space<vmem>>, vector<1x16x16xbf16>
    %89 = vector.shape_cast %88 : vector<1x16x16xbf16> to vector<16x16xbf16>
    %cst_85 = arith.constant dense<0.000000e+00> : vector<16x384xf32>
    %90 = tpu.matmul %89, %87, %cst_85 {dimension_numbers = #tpu.dot_dimension_numbers<[1], [0], [0], [1], [0, 0, 1, 1], [], []>} : vector<16x16xbf16>, vector<16x384xbf16>, vector<16x384xf32> -> vector<16x384xf32>
    %91 = arith.addf %86, %90 : vector<16x384xf32>
    %c0_86 = arith.constant 0 : index
    %c151 = arith.constant 151 : index
    %92 = vector.load %arg8[%c0_86, %c151] : memref<16x640xbf16, #tpu.memory_space<vmem>>, vector<16x384xbf16>
    %c6_87 = arith.constant 6 : index
    %c0_88 = arith.constant 0 : index
    %c0_89 = arith.constant 0 : index
    %93 = vector.load %arg3[%c6_87, %c0_88, %c0_89] : memref<9x16x16xbf16, #tpu.memory_space<vmem>>, vector<1x16x16xbf16>
    %94 = vector.shape_cast %93 : vector<1x16x16xbf16> to vector<16x16xbf16>
    %cst_90 = arith.constant dense<0.000000e+00> : vector<16x384xf32>
    %95 = tpu.matmul %94, %92, %cst_90 {dimension_numbers = #tpu.dot_dimension_numbers<[1], [0], [0], [1], [0, 0, 1, 1], [], []>} : vector<16x16xbf16>, vector<16x384xbf16>, vector<16x384xf32> -> vector<16x384xf32>
    %96 = arith.addf %91, %95 : vector<16x384xf32>
    %c0_91 = arith.constant 0 : index
    %c152 = arith.constant 152 : index
    %97 = vector.load %arg8[%c0_91, %c152] : memref<16x640xbf16, #tpu.memory_space<vmem>>, vector<16x384xbf16>
    %c7_92 = arith.constant 7 : index
    %c0_93 = arith.constant 0 : index
    %c0_94 = arith.constant 0 : index
    %98 = vector.load %arg3[%c7_92, %c0_93, %c0_94] : memref<9x16x16xbf16, #tpu.memory_space<vmem>>, vector<1x16x16xbf16>
    %99 = vector.shape_cast %98 : vector<1x16x16xbf16> to vector<16x16xbf16>
    %cst_95 = arith.constant dense<0.000000e+00> : vector<16x384xf32>
    %100 = tpu.matmul %99, %97, %cst_95 {dimension_numbers = #tpu.dot_dimension_numbers<[1], [0], [0], [1], [0, 0, 1, 1], [], []>} : vector<16x16xbf16>, vector<16x384xbf16>, vector<16x384xf32> -> vector<16x384xf32>
    %101 = arith.addf %96, %100 : vector<16x384xf32>
    %c0_96 = arith.constant 0 : index
    %c153 = arith.constant 153 : index
    %102 = vector.load %arg8[%c0_96, %c153] : memref<16x640xbf16, #tpu.memory_space<vmem>>, vector<16x384xbf16>
    %c8_97 = arith.constant 8 : index
    %c0_98 = arith.constant 0 : index
    %c0_99 = arith.constant 0 : index
    %103 = vector.load %arg3[%c8_97, %c0_98, %c0_99] : memref<9x16x16xbf16, #tpu.memory_space<vmem>>, vector<1x16x16xbf16>
    %104 = vector.shape_cast %103 : vector<1x16x16xbf16> to vector<16x16xbf16>
    %cst_100 = arith.constant dense<0.000000e+00> : vector<16x384xf32>
    %105 = tpu.matmul %104, %102, %cst_100 {dimension_numbers = #tpu.dot_dimension_numbers<[1], [0], [0], [1], [0, 0, 1, 1], [], []>} : vector<16x16xbf16>, vector<16x384xbf16>, vector<16x384xf32> -> vector<16x384xf32>
    %106 = arith.addf %101, %105 : vector<16x384xf32>
    %c1_101 = arith.constant 1 : index
    %c0_102 = arith.constant 0 : index
    %c0_103 = arith.constant 0 : index
    %107 = vector.load %arg4[%c1_101, %c0_102, %c0_103] : memref<2x16x1xf32, #tpu.memory_space<vmem>>, vector<1x16x1xf32>
    %108 = vector.shape_cast %107 : vector<1x16x1xf32> to vector<16x1xf32>
    %109 = vector.broadcast %108 : vector<16x1xf32> to vector<16x384xf32>
    %110 = arith.addf %106, %109 : vector<16x384xf32>
    %c0_104 = arith.constant 0 : index
    %c0_105 = arith.constant 0 : index
    %c25_106 = arith.constant 25 : index
    %111 = vector.load %arg1[%c0_104, %c0_105, %c25_106] : memref<1x16x456xf32, #tpu.memory_space<vmem>>, vector<1x16x384xf32>
    %112 = vector.shape_cast %111 : vector<1x16x384xf32> to vector<16x384xf32>
    %113 = arith.addf %110, %112 : vector<16x384xf32>
    %c0_107 = arith.constant 0 : index
    %c0_108 = arith.constant 0 : index
    %c0_109 = arith.constant 0 : index
    %114 = vector.load %arg6[%c0_107, %c0_108, %c0_109] : memref<1x16x384xf32, #tpu.memory_space<vmem>>, vector<1x16x384xf32>
    %115 = vector.shape_cast %114 : vector<1x16x384xf32> to vector<16x384xf32>
    %116 = vector.shape_cast %113 : vector<16x384xf32> to vector<1x16x384xf32>
    tpu.vector_store %arg6[%c0_107, %c0_108, %c0_109], %116 {strides = array<i32>} : memref<1x16x384xf32, #tpu.memory_space<vmem>>, vector<1x16x384xf32>,
    return
  }
  func.func @transform_0(%arg0: i32) -> (i32, i32, i32) {
    %c0_i32 = arith.constant 0 : i32
    %c0_i32_0 = arith.constant 0 : i32
    %c0_i32_1 = arith.constant 0 : i32
    return %arg0, %c0_i32, %c0_i32_0 : i32, i32, i32
  }
  func.func @transform_1(%arg0: i32) -> (i32, i32, i32) {
    %c0_i32 = arith.constant 0 : i32
    %c0_i32_0 = arith.constant 0 : i32
    %c0_i32_1 = arith.constant 0 : i32
    %c0_i32_2 = arith.constant 0 : i32
    return %c0_i32, %c0_i32_0, %c0_i32_1 : i32, i32, i32
  }
  func.func @transform_2(%arg0: i32) -> (i32, i32, i32) {
    %c0_i32 = arith.constant 0 : i32
    %c0_i32_0 = arith.constant 0 : i32
    %c0_i32_1 = arith.constant 0 : i32
    %c0_i32_2 = arith.constant 0 : i32
    return %c0_i32, %c0_i32_0, %c0_i32_1 : i32, i32, i32
  }
  func.func @transform_3(%arg0: i32) -> (i32, i32, i32) {
    %c0_i32 = arith.constant 0 : i32
    %c0_i32_0 = arith.constant 0 : i32
    %c0_i32_1 = arith.constant 0 : i32
    %c0_i32_2 = arith.constant 0 : i32
    return %c0_i32, %c0_i32_0, %c0_i32_1 : i32, i32, i32
  }
  func.func @transform_4(%arg0: i32) -> (i32, i32) {
    %c0_i32 = arith.constant 0 : i32
    %c0_i32_0 = arith.constant 0 : i32
    %c0_i32_1 = arith.constant 0 : i32
    return %c0_i32, %c0_i32_0 : i32, i32
  }
  func.func @transform_5(%arg0: i32) -> (i32, i32, i32) {
    %c0_i32 = arith.constant 0 : i32
    %c0_i32_0 = arith.constant 0 : i32
    %c0_i32_1 = arith.constant 0 : i32
    return %arg0, %c0_i32, %c0_i32_0 : i32, i32, i32
  }
}

</mosaic_0001>

<llo_original>
// kernel: basic_block_forward.1
$region0: #{basic_block_forward.1}
  #allocation0 [shape = 'u32[]', space=smem, size = 0x4, offset = 0x4, fixed_abs, tag = 'smem constant byte address 0x4 - core index']
  #allocation1 [shape = 'u32[144,128]{1,0:T(1,128)}', space=vmem, size = 0x12000, scoped, tag = 'internal scratch']
  #allocation2 [shape = 'bf16[16,456]{1,0:T(16,128)(2,1)}', space=vmem, size = 0x4000, scoped, tag = 'scratch operand']
  #allocation3 [shape = 'bf16[16,640]{1,0:T(16,128)(2,1)}', space=vmem, size = 0x5000, scoped, tag = 'scratch operand']
  %s0 = inlined_call_operand.vmem [shape: f32[2,16,456], index: 0, kind: input, shape index: {}]
  %s1 = inlined_call_operand.vmem [shape: bf16[9,16,16], index: 1, kind: input, shape index: {}]
  %s2 = inlined_call_operand.vmem [shape: bf16[9,16,16], index: 2, kind: input, shape index: {}]
  %s3 = inlined_call_operand.vmem [shape: f32[2,16,1], index: 3, kind: input, shape index: {}]
  %s4 = inlined_call_operand.vmem [shape: f32[1,384], index: 4, kind: input, shape index: {}]
  %s5 = inlined_call_operand.vmem [shape: f32[2,16,384], index: 5, kind: output, shape index: {}]
  %s6 = sld [smem:[#allocation0]]
  $region53: #{basic_block_forward.1} parent=0
    _
  %s8 = ssub.s32 1, %s6
  %s9 = scalar_select 0, %s8, %s6
  loop: start=0, step=1, limit=4
  $region2: #{basic_block_forward.1} parent=0 // loop_pre_header
    _
  $region3: #{basic_block_forward.1} parent=0 // loop_header
    %s11 = sphi 0, %s15
    %p12 = scmp.ge.s32.totalorder %s11, 4
    %s21 = sphi 0, %s23
    %s24 = sphi 0, %s21
    %s25 = sphi 0, %s24
    %s41 = sphi 0, %s25
    %s45 = sphi 0, %s45
    %s47 = sphi 0, %s45
    %s48 = sphi 0, %s47
    %s62 = sphi 0, %s48
    %s66 = sphi 0, %s66
    %s68 = sphi 0, %s66
    %s69 = sphi 0, %s68
    %s83 = sphi 0, %s69
    %s87 = sphi 0, %s87
    %s89 = sphi 0, %s87
    %s90 = sphi 0, %s89
    %s104 = sphi 0, %s90
    %s108 = sphi 0, %s108
    %s110 = sphi 0, %s108
    %s111 = sphi 0, %s110
    %s125 = sphi 0, %s111
    %s131 = sphi 0, %s133
    %s134 = sphi 0, %s131
    %s135 = sphi 0, %s134
    %s151 = sphi 0, %s135
  $region4: #{basic_block_forward.1} parent=0 // loop_header_branch
    %14 = sbr.rel (%p12) target = $region8
  $region5: #{basic_block_forward.1} parent=0 // loop_body
    %s16 = ssub.s32 %s11, 1
    %s17 = ssub.s32 %s11, 2
    %s18 = sadd.s32 %s11, 1
    %s19 = ssub.s32 %s11, %s18
    %p20 = scmp.eq.s32.totalorder %s19, 0
    %s22 = sadd.s32 %s21, 1
    %s23 = scalar_select %p20, %s21, %s22
    %p26 = pneg %p20
    %p27 = scmp.eq.s32.totalorder %s11, 1
    %p28 = por %p26, %p27
    %p29 = scmp.ne.s32.totalorder %s21, %s24
    %p30 = scmp.eq.s32.totalorder %s11, 0
    %p31 = por %p29, %p30
    %p32 = scmp.ne.s32.totalorder %s21, %s24
    %p33 = scmp.eq.s32.totalorder %s16, 1
    %p34 = por %p32, %p33
    %p35 = scmp.ne.s32.totalorder %s24, %s25
    %p36 = scmp.eq.s32.totalorder %s16, 0
    %p37 = por %p35, %p36
    %p38 = scmp.ne.s32.totalorder %s24, %s25
    %p39 = scmp.eq.s32.totalorder %s17, 1
    %p40 = por %p38, %p39
    %p42 = scmp.ne.s32.totalorder %s25, %s41
    %p43 = scmp.eq.s32.totalorder %s17, 0
    %p44 = por %p42, %p43
    %s46 = sadd.s32 %s45, 1
    %p49 = scmp.eq.s32.totalorder %s11, 1
    %p50 = scmp.ne.s32.totalorder %s45, %s47
    %p51 = scmp.eq.s32.totalorder %s11, 0
    %p52 = por %p50, %p51
    %p53 = scmp.ne.s32.totalorder %s45, %s47
    %p54 = scmp.eq.s32.totalorder %s16, 1
    %p55 = por %p53, %p54
    %p56 = scmp.ne.s32.totalorder %s47, %s48
    %p57 = scmp.eq.s32.totalorder %s16, 0
    %p58 = por %p56, %p57
    %p59 = scmp.ne.s32.totalorder %s47, %s48
    %p60 = scmp.eq.s32.totalorder %s17, 1
    %p61 = por %p59, %p60
    %p63 = scmp.ne.s32.totalorder %s48, %s62
    %p64 = scmp.eq.s32.totalorder %s17, 0
    %p65 = por %p63, %p64
    %s67 = sadd.s32 %s66, 1
    %p70 = scmp.eq.s32.totalorder %s11, 1
    %p71 = scmp.ne.s32.totalorder %s66, %s68
    %p72 = scmp.eq.s32.totalorder %s11, 0
    %p73 = por %p71, %p72
    %p74 = scmp.ne.s32.totalorder %s66, %s68
    %p75 = scmp.eq.s32.totalorder %s16, 1
    %p76 = por %p74, %p75
    %p77 = scmp.ne.s32.totalorder %s68, %s69
    %p78 = scmp.eq.s32.totalorder %s16, 0
    %p79 = por %p77, %p78
    %p80 = scmp.ne.s32.totalorder %s68, %s69
    %p81 = scmp.eq.s32.totalorder %s17, 1
    %p82 = por %p80, %p81
    %p84 = scmp.ne.s32.totalorder %s69, %s83
    %p85 = scmp.eq.s32.totalorder %s17, 0
    %p86 = por %p84, %p85
    %s88 = sadd.s32 %s87, 1
    %p91 = scmp.eq.s32.totalorder %s11, 1
    %p92 = scmp.ne.s32.totalorder %s87, %s89
    %p93 = scmp.eq.s32.totalorder %s11, 0
    %p94 = por %p92, %p93
    %p95 = scmp.ne.s32.totalorder %s87, %s89
    %p96 = scmp.eq.s32.totalorder %s16, 1
    %p97 = por %p95, %p96
    %p98 = scmp.ne.s32.totalorder %s89, %s90
    %p99 = scmp.eq.s32.totalorder %s16, 0
    %p100 = por %p98, %p99
    %p101 = scmp.ne.s32.totalorder %s89, %s90
    %p102 = scmp.eq.s32.totalorder %s17, 1
    %p103 = por %p101, %p102
    %p105 = scmp.ne.s32.totalorder %s90, %s104
    %p106 = scmp.eq.s32.totalorder %s17, 0
    %p107 = por %p105, %p106
    %s109 = sadd.s32 %s108, 1
    %p112 = scmp.eq.s32.totalorder %s11, 1
    %p113 = scmp.ne.s32.totalorder %s108, %s110
    %p114 = scmp.eq.s32.totalorder %s11, 0
    %p115 = por %p113, %p114
    %p116 = scmp.ne.s32.totalorder %s108, %s110
    %p117 = scmp.eq.s32.totalorder %s16, 1
    %p118 = por %p116, %p117
    %p119 = scmp.ne.s32.totalorder %s110, %s111
    %p120 = scmp.eq.s32.totalorder %s16, 0
    %p121 = por %p119, %p120
    %p122 = scmp.ne.s32.totalorder %s110, %s111
    %p123 = scmp.eq.s32.totalorder %s17, 1
    %p124 = por %p122, %p123
    %p126 = scmp.ne.s32.totalorder %s111, %s125
    %p127 = scmp.eq.s32.totalorder %s17, 0
    %p128 = por %p126, %p127
    %s129 = ssub.s32 %s11, %s18
    %p130 = scmp.eq.s32.totalorder %s129, 0
    %s132 = sadd.s32 %s131, 1
    %s133 = scalar_select %p130, %s131, %s132
    %p136 = pneg %p130
    %p137 = scmp.eq.s32.totalorder %s11, 1
    %p138 = por %p136, %p137
    %p139 = scmp.ne.s32.totalorder %s131, %s134
    %p140 = scmp.eq.s32.totalorder %s11, 0
    %p141 = por %p139, %p140
    %p142 = scmp.ne.s32.totalorder %s131, %s134
    %p143 = scmp.eq.s32.totalorder %s16, 1
    %p144 = por %p142, %p143
    %p145 = scmp.ne.s32.totalorder %s134, %s135
    %p146 = scmp.eq.s32.totalorder %s16, 0
    %p147 = por %p145, %p146
    %p148 = scmp.ne.s32.totalorder %s134, %s135
    %p149 = scmp.eq.s32.totalorder %s17, 1
    %p150 = por %p148, %p149
    %p152 = scmp.ne.s32.totalorder %s135, %s151
    %p153 = scmp.eq.s32.totalorder %s17, 0
    %p154 = por %p152, %p153
    %p155 = scmp.le.s32.totalorder 1, %s11
    %p156 = scmp.lt.s32.totalorder %s11, 3
    %p157 = pnand %p155, %p156
    %p158 = pneg %p157
    // Predicated region
    $region9: #{basic_block_forward.1} parent=5 // pred_check
      _
    $region10: #{basic_block_forward.1} parent=5 // pred_check_branch
      %160 = sbr.rel (%p157) target = $region12
    $region11: #{basic_block_forward.1} parent=5 // pred_region
      %s161 = ssub.s32 %s11, 1
      // Predicated region
      $region13: #{basic_block_forward.1} parent=11 // pred_check
        %p162 = pneg %p58
      $region14: #{basic_block_forward.1} parent=11 // pred_check_branch
        %164 = sbr.rel (%p162) target = $region16
      $region15: #{basic_block_forward.1} parent=11 // pred_region
        _
      $region16: #{basic_block_forward.1} parent=11 // pred_fallthru
        _
      // Predicated region
      $region17: #{basic_block_forward.1} parent=11 // pred_check
        %p165 = pneg %p79
      $region18: #{basic_block_forward.1} parent=11 // pred_check_branch
        %167 = sbr.rel (%p165) target = $region20
      $region19: #{basic_block_forward.1} parent=11 // pred_region
        _
      $region20: #{basic_block_forward.1} parent=11 // pred_fallthru
        _
      // Predicated region
      $region21: #{basic_block_forward.1} parent=11 // pred_check
        %p168 = pneg %p100
      $region22: #{basic_block_forward.1} parent=11 // pred_check_branch
        %170 = sbr.rel (%p168) target = $region24
      $region23: #{basic_block_forward.1} parent=11 // pred_region
        _
      $region24: #{basic_block_forward.1} parent=11 // pred_fallthru
        _
      // Predicated region
      $region25: #{basic_block_forward.1} parent=11 // pred_check
        %p171 = pneg %p121
      $region26: #{basic_block_forward.1} parent=11 // pred_check_branch
        %173 = sbr.rel (%p171) target = $region28
      $region27: #{basic_block_forward.1} parent=11 // pred_region
        _
      $region28: #{basic_block_forward.1} parent=11 // pred_fallthru
        _
    $region12: #{basic_block_forward.1} parent=5 // pred_fallthru
      _
    %p174 = scmp.lt.s32.totalorder %s11, 2
    // Predicated region
    $region29: #{basic_block_forward.1} parent=5 // pred_check
      %p175 = pneg %p174
    $region30: #{basic_block_forward.1} parent=5 // pred_check_branch
      %177 = sbr.rel (%p175) target = $region32
    $region31: #{basic_block_forward.1} parent=5 // pred_region
      // Predicated region
      $region33: #{basic_block_forward.1} parent=31 // pred_check
        %p178 = pneg %p31
      $region34: #{basic_block_forward.1} parent=31 // pred_check_branch
        %180 = sbr.rel (%p178) target = $region36
      $region35: #{basic_block_forward.1} parent=31 // pred_region
        %p181 = scmp.lt.s32.totalorder %s11, 1
        %s182 = scalar_select %p181, %s11, 1
        %s183 = smul.addr %s182, 8
        %s184 = smul.addr %s183, 8
        %s185 = scalar_lea.vmem %s0, %s184
      $region36: #{basic_block_forward.1} parent=31 // pred_fallthru
        _
    $region32: #{basic_block_forward.1} parent=5 // pred_fallthru
      _
    %p186 = scmp.le.s32.totalorder 1, %s11
    %p187 = scmp.lt.s32.totalorder %s11, 3
    %p188 = pnand %p186, %p187
    %p189 = pneg %p188
    // Predicated region
    $region37: #{basic_block_forward.1} parent=5 // pred_check
      _
    $region38: #{basic_block_forward.1} parent=5 // pred_check_branch
      %191 = sbr.rel (%p188) target = $region40
    $region39: #{basic_block_forward.1} parent=5 // pred_region
      %s192 = ssub.s32 %s11, 1
      %p193 = scmp.lt.s32.totalorder %s16, 1
      %s194 = scalar_select %p193, %s16, 1
      %s195 = smul.addr %s194, 8
      %s196 = smul.addr %s195, 8
      %s197 = scalar_lea.vmem %s0, %s196
      %p198 = pneg %p37
      %p199 = pneg %p34
      %p200 = pneg %p58
      %p201 = pneg %p55
      %p202 = pneg %p79
      %p203 = pneg %p76
      %p204 = pneg %p100
      %p205 = pneg %p97
      %p206 = pneg %p121
      %p207 = pneg %p118
      %p208 = pneg %p147
      %p209 = pneg %p144
      %p210 = scmp.lt.s32.totalorder %s16, 1
      %s211 = scalar_select %p210, %s16, 1
      %s212 = smul.addr %s211, 6
      %s213 = smul.addr %s212, 8
      %s214 = scalar_lea.vmem %s5, %s213
      %p215 = scmp.lt.s32.totalorder %s16, 1
      %s216 = scalar_select %p215, %s16, 1
      %s217 = smul.addr %s216, 8
      %s218 = smul.addr %s217, 8
      %s219 = scalar_lea.vmem %s0, %s218
      %p220 = scmp.lt.s32.totalorder %s16, 1
      %s221 = scalar_select %p220, %s16, 1
      %s222 = smul.addr %s221, 6
      %s223 = smul.addr %s222, 8
      %s224 = scalar_lea.vmem %s5, %s223
      %v226 = vld [vmem:[%s219] sm:$0xff]
      %v227 = vld [vmem:[%s219 + $0x8] sm:$0xff]
      %v228 = vld [vmem:[%s219 + $0x10] sm:$0xff]
      %v229 = vld [vmem:[%s219 + $0x18] sm:$0xff]
      %v230 = vld [vmem:[%s219 + $0x20] sm:$0xff]
      %v231 = vld [vmem:[%s219 + $0x28] sm:$0xff]
      %v232 = vld [vmem:[%s219 + $0x30] sm:$0xff]
      %v233 = vld [vmem:[%s219 + $0x38] sm:$0xff]
      %v234 = vpack.c.bf16 %v230, %v226
      %v235 = vpack.c.bf16 %v231, %v227
      %v236 = vpack.c.bf16 %v232, %v228
      %v237 = vpack.c.bf16 %v233, %v229
      %238 = vst [vmem:[#allocation2] sm:$0xff] %v234
      %239 = vst [vmem:[#allocation2 + $0x8] sm:$0xff] %v235
      %240 = vst [vmem:[#allocation2 + $0x10] sm:$0xff] %v236
      %vm241 = vcmask 588800
      %242 = vst.msk [vmem:[#allocation2 + $0x18] sm:$0xff] %vm241, %v237
      %243 = vst [vmem:[#allocation3] sm:$0xff] 0
      %244 = vst [vmem:[#allocation3 + $0x20] sm:$0xff] 0
      %v245 = vld [vmem:[#allocation2] sm:$0xff]
      %v246 = vld [vmem:[#allocation2 + $0x8] sm:$0xff]
      %v247 = vld [vmem:[#allocation2 + $0x10] sm:$0xff]
      %v248 = vld [vmem:[%s1] sm:$0xf]
      %v249 = vld [vmem:[%s1 + $0x4] sm:$0xf]
      %v250 = vld [vmem:[#allocation2 + $0x18] sm:$0xff]
      %s251 = scalar_lea.vmem %s1, 8
      %v252 = vld [vmem:[%s251] sm:$0xf]
      %v253 = vld [vmem:[%s251 + $0x4] sm:$0xf]
      %v256 = vunpack.c.l.b16 %v252
      %v257 = vunpack.c.l.b16 %v253
      %v258 = vpack.c.b16 %v257, %v256
      %263 = vrot.lane.b32.xlu0 %v245, 127
      %v264 = vpop.permute.xlu0 %263
      %265 = vrot.lane.b32.xlu0 %v246, 127
      %v266 = vpop.permute.xlu0 %265
      %267 = vrot.lane.b32.xlu0 %v247, 127
      %v268 = vpop.permute.xlu0 %267
      %269 = vrot.lane.b32.xlu0 %v250, 127
      %v270 = vpop.permute.xlu0 %269
      %vm271 = vcmask 1039360
      %v272 = vsel %vm271, %v264, %v266
      %v273 = vsel %vm271, %v266, %v268
      %v274 = vsel %vm271, %v268, %v270
      %vm278 = vcmask 130048
      %v280 = vsel %vm278, %v258, 0
      %282 = vmatprep.subr.bf16.mxu0 %v273
      %283 = vmatpush1.bf16.msra.mxu0 %v272
      %284 = vmatprep.subr.bf16.mxu0 0
      %285 = vmatpush1.bf16.msra.mxu0 0
      %286 = vmatprep.subr.bf16.mxu0 0
      %287 = vmatpush1.bf16.msra.mxu0 0
      %288 = vmatprep.subr.bf16.mxu0 0
      %289 = vmatpush1.bf16.msra.mxu0 0
      %290 = vmatprep.subr.bf16.mxu0 0
      %291 = vmatpush1.bf16.msra.mxu0 0
      %292 = vmatprep.subr.bf16.mxu0 0
      %293 = vmatpush1.bf16.msra.mxu0 0
      %294 = vmatprep.subr.bf16.mxu0 0
      %295 = vmatpush1.bf16.msra.mxu0 0
      %296 = vmatprep.subr.bf16.mxu0 0
      %297 = vmatpush1.bf16.msra.mxu0 0
      %298 = vmatprep.subr.bf16.mxu0 0
      %299 = vmatpush1.bf16.msra.mxu0 0
      %300 = vmatprep.subr.bf16.mxu0 0
      %301 = vmatpush1.bf16.msra.mxu0 0
      %302 = vmatprep.subr.bf16.mxu0 0
      %303 = vmatpush1.bf16.msra.mxu0 0
      %304 = vmatprep.subr.bf16.mxu0 0
      %305 = vmatpush1.bf16.msra.mxu0 0
      %306 = vmatprep.subr.bf16.mxu0 0
      %307 = vmatpush1.bf16.msra.mxu0 0
      %308 = vmatprep.subr.bf16.mxu0 0
      %309 = vmatpush1.bf16.msra.mxu0 0
      %310 = vmatprep.subr.bf16.mxu0 0
      %311 = vmatpush1.bf16.msra.mxu0 0
      %312 = vmatprep.subr.bf16.mxu0 0
      %313 = vmatpush1.bf16.msra.mxu0 0
      %314 = vmatprep.mubr.bf16.mxu0 0
      %315 = vmatmul.mubr.bf16.gmra.mrb[0].mxu0 %v280
      %v316 = vpop.f32.mrb[0].mxu0
      %v317 = vadd.f32 0.0, %v316
      %v318 = vpop.f32.mrb[0].mxu0
      %v319 = vadd.f32 0.0, %v318
      %v320 = vpop.f32.mrb[0].mxu0
      %v321 = vadd.f32 0.0, %v320
      %v322 = vpop.f32.mrb[0].mxu0
      %v323 = vadd.f32 0.0, %v322
      %324 = vdwg.mxu0
      %325 = vmatprep.subr.bf16.mxu0 0
      %326 = vmatpush1.bf16.msra.mxu0 %v274
      %327 = vmatprep.subr.bf16.mxu0 0
      %328 = vmatpush1.bf16.msra.mxu0 0
      %329 = vmatprep.subr.bf16.mxu0 0
      %330 = vmatpush1.bf16.msra.mxu0 0
      %331 = vmatprep.subr.bf16.mxu0 0
      %332 = vmatpush1.bf16.msra.mxu0 0
      %333 = vmatprep.subr.bf16.mxu0 0
      %334 = vmatpush1.bf16.msra.mxu0 0
      %335 = vmatprep.subr.bf16.mxu0 0
      %336 = vmatpush1.bf16.msra.mxu0 0
      %337 = vmatprep.subr.bf16.mxu0 0
      %338 = vmatpush1.bf16.msra.mxu0 0
      %339 = vmatprep.subr.bf16.mxu0 0
      %340 = vmatpush1.bf16.msra.mxu0 0
      %341 = vmatprep.subr.bf16.mxu0 0
      %342 = vmatpush1.bf16.msra.mxu0 0
      %343 = vmatprep.subr.bf16.mxu0 0
      %344 = vmatpush1.bf16.msra.mxu0 0
      %345 = vmatprep.subr.bf16.mxu0 0
      %346 = vmatpush1.bf16.msra.mxu0 0
      %347 = vmatprep.subr.bf16.mxu0 0
      %348 = vmatpush1.bf16.msra.mxu0 0
      %349 = vmatprep.subr.bf16.mxu0 0
      %350 = vmatpush1.bf16.msra.mxu0 0
      %351 = vmatprep.subr.bf16.mxu0 0
      %352 = vmatpush1.bf16.msra.mxu0 0
      %353 = vmatprep.subr.bf16.mxu0 0
      %354 = vmatpush1.bf16.msra.mxu0 0
      %355 = vmatprep.subr.bf16.mxu0 0
      %356 = vmatpush1.bf16.msra.mxu0 0
      %357 = vmatprep.mubr.bf16.mxu0 0
      %358 = vmatmul.mubr.bf16.gmra.mrb[0].mxu0 %v280
      %v359 = vpop.f32.mrb[0].mxu0
      %v360 = vadd.f32 0.0, %v359
      %v361 = vpop.f32.mrb[0].mxu0
      %v362 = vpop.f32.mrb[0].mxu0
      %v363 = vadd.f32 0.0, %v362
      %v364 = vpop.f32.mrb[0].mxu0
      %365 = vdwg.mxu0
      %v368 = vunpack.c.l.b16 %v248
      %v369 = vunpack.c.l.b16 %v249
      %v370 = vpack.c.b16 %v369, %v368
      %v372 = vsel %vm278, %v370, 0
      %374 = vmatprep.subr.bf16.mxu0 %v246
      %375 = vmatpush1.bf16.msra.mxu0 %v245
      %376 = vmatprep.subr.bf16.mxu0 0
      %377 = vmatpush1.bf16.msra.mxu0 0
      %378 = vmatprep.subr.bf16.mxu0 0
      %379 = vmatpush1.bf16.msra.mxu0 0
      %380 = vmatprep.subr.bf16.mxu0 0
      %381 = vmatpush1.bf16.msra.mxu0 0
      %382 = vmatprep.subr.bf16.mxu0 0
      %383 = vmatpush1.bf16.msra.mxu0 0
      %384 = vmatprep.subr.bf16.mxu0 0
      %385 = vmatpush1.bf16.msra.mxu0 0
      %386 = vmatprep.subr.bf16.mxu0 0
      %387 = vmatpush1.bf16.msra.mxu0 0
      %388 = vmatprep.subr.bf16.mxu0 0
      %389 = vmatpush1.bf16.msra.mxu0 0
      %390 = vmatprep.subr.bf16.mxu0 0
      %391 = vmatpush1.bf16.msra.mxu0 0
      %392 = vmatprep.subr.bf16.mxu0 0
      %393 = vmatpush1.bf16.msra.mxu0 0
      %394 = vmatprep.subr.bf16.mxu0 0
      %395 = vmatpush1.bf16.msra.mxu0 0
      %396 = vmatprep.subr.bf16.mxu0 0
      %397 = vmatpush1.bf16.msra.mxu0 0
      %398 = vmatprep.subr.bf16.mxu0 0
      %399 = vmatpush1.bf16.msra.mxu0 0
      %400 = vmatprep.subr.bf16.mxu0 0
      %401 = vmatpush1.bf16.msra.mxu0 0
      %402 = vmatprep.subr.bf16.mxu0 0
      %403 = vmatpush1.bf16.msra.mxu0 0
      %404 = vmatprep.subr.bf16.mxu0 0
      %405 = vmatpush1.bf16.msra.mxu0 0
      %406 = vmatprep.mubr.bf16.mxu0 0
      %407 = vmatmul.mubr.bf16.gmra.mrb[0].mxu0 %v372
      %v408 = vpop.f32.mrb[0].mxu0
      %v409 = vadd.f32 %v317, %v408
      %v410 = vpop.f32.mrb[0].mxu0
      %v411 = vadd.f32 %v319, %v410
      %v412 = vpop.f32.mrb[0].mxu0
      %v413 = vadd.f32 %v321, %v412
      %v414 = vpop.f32.mrb[0].mxu0
      %v415 = vadd.f32 %v323, %v414
      %416 = vdwg.mxu0
      %417 = vmatprep.subr.bf16.mxu0 0
      %418 = vmatpush1.bf16.msra.mxu0 %v247
      %419 = vmatprep.subr.bf16.mxu0 0
      %420 = vmatpush1.bf16.msra.mxu0 0
      %421 = vmatprep.subr.bf16.mxu0 0
      %422 = vmatpush1.bf16.msra.mxu0 0
      %423 = vmatprep.subr.bf16.mxu0 0
      %424 = vmatpush1.bf16.msra.mxu0 0
      %425 = vmatprep.subr.bf16.mxu0 0
      %426 = vmatpush1.bf16.msra.mxu0 0
      %427 = vmatprep.subr.bf16.mxu0 0
      %428 = vmatpush1.bf16.msra.mxu0 0
      %429 = vmatprep.subr.bf16.mxu0 0
      %430 = vmatpush1.bf16.msra.mxu0 0
      %431 = vmatprep.subr.bf16.mxu0 0
      %432 = vmatpush1.bf16.msra.mxu0 0
      %433 = vmatprep.subr.bf16.mxu0 0
      %434 = vmatpush1.bf16.msra.mxu0 0
      %435 = vmatprep.subr.bf16.mxu0 0
      %436 = vmatpush1.bf16.msra.mxu0 0
      %437 = vmatprep.subr.bf16.mxu0 0
      %438 = vmatpush1.bf16.msra.mxu0 0
      %439 = vmatprep.subr.bf16.mxu0 0
      %440 = vmatpush1.bf16.msra.mxu0 0
      %441 = vmatprep.subr.bf16.mxu0 0
      %442 = vmatpush1.bf16.msra.mxu0 0
      %443 = vmatprep.subr.bf16.mxu0 0
      %444 = vmatpush1.bf16.msra.mxu0 0
      %445 = vmatprep.subr.bf16.mxu0 0
      %446 = vmatpush1.bf16.msra.mxu0 0
      %447 = vmatprep.subr.bf16.mxu0 0
      %448 = vmatpush1.bf16.msra.mxu0 0
      %449 = vmatprep.mubr.bf16.mxu0 0
      %450 = vmatmul.mubr.bf16.gmra.mrb[0].mxu0 %v372
      %v451 = vpop.f32.mrb[0].mxu0
      %v452 = vadd.f32 %v360, %v451
      %v453 = vpop.f32.mrb[0].mxu0
      %v454 = vpop.f32.mrb[0].mxu0
      %v455 = vadd.f32 %v363, %v454
      %v456 = vpop.f32.mrb[0].mxu0
      %457 = vdwg.mxu0
      %s458 = scalar_lea.vmem %s1, 16
      %v459 = vld [vmem:[%s458] sm:$0xf]
      %v460 = vld [vmem:[%s458 + $0x4] sm:$0xf]
      %v463 = vunpack.c.l.b16 %v459
      %v464 = vunpack.c.l.b16 %v460
      %v465 = vpack.c.b16 %v464, %v463
      %466 = vrot.lane.b32.xlu0 %v245, 126
      %v467 = vpop.permute.xlu0 %466
      %468 = vrot.lane.b32.xlu0 %v246, 126
      %v469 = vpop.permute.xlu0 %468
      %470 = vrot.lane.b32.xlu0 %v247, 126
      %v471 = vpop.permute.xlu0 %470
      %472 = vrot.lane.b32.xlu0 %v250, 126
      %v473 = vpop.permute.xlu0 %472
      %vm474 = vcmask 1031168
      %v475 = vsel %vm474, %v467, %v469
      %v476 = vsel %vm474, %v469, %v471
      %v477 = vsel %vm474, %v471, %v473
      %v482 = vsel %vm278, %v465, 0
      %484 = vmatprep.subr.bf16.mxu0 %v476
      %485 = vmatpush1.bf16.msra.mxu0 %v475
      %486 = vmatprep.subr.bf16.mxu0 0
      %487 = vmatpush1.bf16.msra.mxu0 0
      %488 = vmatprep.subr.bf16.mxu0 0
      %489 = vmatpush1.bf16.msra.mxu0 0
      %490 = vmatprep.subr.bf16.mxu0 0
      %491 = vmatpush1.bf16.msra.mxu0 0
      %492 = vmatprep.subr.bf16.mxu0 0
      %493 = vmatpush1.bf16.msra.mxu0 0
      %494 = vmatprep.subr.bf16.mxu0 0
      %495 = vmatpush1.bf16.msra.mxu0 0
      %496 = vmatprep.subr.bf16.mxu0 0
      %497 = vmatpush1.bf16.msra.mxu0 0
      %498 = vmatprep.subr.bf16.mxu0 0
      %499 = vmatpush1.bf16.msra.mxu0 0
      %500 = vmatprep.subr.bf16.mxu0 0
      %501 = vmatpush1.bf16.msra.mxu0 0
      %502 = vmatprep.subr.bf16.mxu0 0
      %503 = vmatpush1.bf16.msra.mxu0 0
      %504 = vmatprep.subr.bf16.mxu0 0
      %505 = vmatpush1.bf16.msra.mxu0 0
      %506 = vmatprep.subr.bf16.mxu0 0
      %507 = vmatpush1.bf16.msra.mxu0 0
      %508 = vmatprep.subr.bf16.mxu0 0
      %509 = vmatpush1.bf16.msra.mxu0 0
      %510 = vmatprep.subr.bf16.mxu0 0
      %511 = vmatpush1.bf16.msra.mxu0 0
      %512 = vmatprep.subr.bf16.mxu0 0
      %513 = vmatpush1.bf16.msra.mxu0 0
      %514 = vmatprep.subr.bf16.mxu0 0
      %515 = vmatpush1.bf16.msra.mxu0 0
      %516 = vmatprep.mubr.bf16.mxu0 0
      %517 = vmatmul.mubr.bf16.gmra.mrb[0].mxu0 %v482
      %v518 = vpop.f32.mrb[0].mxu0
      %v519 = vadd.f32 0.0, %v518
      %v520 = vpop.f32.mrb[0].mxu0
      %v521 = vadd.f32 0.0, %v520
      %v522 = vpop.f32.mrb[0].mxu0
      %v523 = vadd.f32 0.0, %v522
      %v524 = vpop.f32.mrb[0].mxu0
      %v525 = vadd.f32 0.0, %v524
      %526 = vdwg.mxu0
      %527 = vmatprep.subr.bf16.mxu0 0
      %528 = vmatpush1.bf16.msra.mxu0 %v477
      %529 = vmatprep.subr.bf16.mxu0 0
      %530 = vmatpush1.bf16.msra.mxu0 0
      %531 = vmatprep.subr.bf16.mxu0 0
      %532 = vmatpush1.bf16.msra.mxu0 0
      %533 = vmatprep.subr.bf16.mxu0 0
      %534 = vmatpush1.bf16.msra.mxu0 0
      %535 = vmatprep.subr.bf16.mxu0 0
      %536 = vmatpush1.bf16.msra.mxu0 0
      %537 = vmatprep.subr.bf16.mxu0 0
      %538 = vmatpush1.bf16.msra.mxu0 0
      %539 = vmatprep.subr.bf16.mxu0 0
      %540 = vmatpush1.bf16.msra.mxu0 0
      %541 = vmatprep.subr.bf16.mxu0 0
      %542 = vmatpush1.bf16.msra.mxu0 0
      %543 = vmatprep.subr.bf16.mxu0 0
      %544 = vmatpush1.bf16.msra.mxu0 0
      %545 = vmatprep.subr.bf16.mxu0 0
      %546 = vmatpush1.bf16.msra.mxu0 0
      %547 = vmatprep.subr.bf16.mxu0 0
      %548 = vmatpush1.bf16.msra.mxu0 0
      %549 = vmatprep.subr.bf16.mxu0 0
      %550 = vmatpush1.bf16.msra.mxu0 0
      %551 = vmatprep.subr.bf16.mxu0 0
      %552 = vmatpush1.bf16.msra.mxu0 0
      %553 = vmatprep.subr.bf16.mxu0 0
      %554 = vmatpush1.bf16.msra.mxu0 0
      %555 = vmatprep.subr.bf16.mxu0 0
      %556 = vmatpush1.bf16.msra.mxu0 0
      %557 = vmatprep.subr.bf16.mxu0 0
      %558 = vmatpush1.bf16.msra.mxu0 0
      %559 = vmatprep.mubr.bf16.mxu0 0
      %560 = vmatmul.mubr.bf16.gmra.mrb[0].mxu0 %v482
      %v561 = vpop.f32.mrb[0].mxu0
      %v562 = vadd.f32 0.0, %v561
      %v563 = vpop.f32.mrb[0].mxu0
      %v564 = vpop.f32.mrb[0].mxu0
      %v565 = vadd.f32 0.0, %v564
      %v566 = vpop.f32.mrb[0].mxu0
      %567 = vdwg.mxu0
      %v568 = vadd.f32 %v409, %v519
      %v569 = vadd.f32 %v411, %v521
      %v570 = vadd.f32 %v452, %v562
      %v571 = vadd.f32 %v413, %v523
      %v572 = vadd.f32 %v415, %v525
      %v573 = vadd.f32 %v455, %v565
      %s574 = scalar_lea.vmem %s1, 24
      %v575 = vld [vmem:[%s574] sm:$0xf]
      %v576 = vld [vmem:[%s574 + $0x4] sm:$0xf]
      %v579 = vunpack.c.l.b16 %v575
      %v580 = vunpack.c.l.b16 %v576
      %v581 = vpack.c.b16 %v580, %v579
      %582 = vrot.lane.b32.xlu0 %v245, 104
      %v583 = vpop.permute.xlu0 %582
      %584 = vrot.lane.b32.xlu0 %v246, 104
      %v585 = vpop.permute.xlu0 %584
      %586 = vrot.lane.b32.xlu0 %v247, 104
      %v587 = vpop.permute.xlu0 %586
      %588 = vrot.lane.b32.xlu0 %v250, 104
      %v589 = vpop.permute.xlu0 %588
      %vm590 = vcmask 850944
      %v591 = vsel %vm590, %v583, %v585
      %v592 = vsel %vm590, %v585, %v587
      %v593 = vsel %vm590, %v587, %v589
      %v598 = vsel %vm278, %v581, 0
      %600 = vmatprep.subr.bf16.mxu0 %v592
      %601 = vmatpush1.bf16.msra.mxu0 %v591
      %602 = vmatprep.subr.bf16.mxu0 0
      %603 = vmatpush1.bf16.msra.mxu0 0
      %604 = vmatprep.subr.bf16.mxu0 0
      %605 = vmatpush1.bf16.msra.mxu0 0
      %606 = vmatprep.subr.bf16.mxu0 0
      %607 = vmatpush1.bf16.msra.mxu0 0
      %608 = vmatprep.subr.bf16.mxu0 0
      %609 = vmatpush1.bf16.msra.mxu0 0
      %610 = vmatprep.subr.bf16.mxu0 0
      %611 = vmatpush1.bf16.msra.mxu0 0
      %612 = vmatprep.subr.bf16.mxu0 0
      %613 = vmatpush1.bf16.msra.mxu0 0
      %614 = vmatprep.subr.bf16.mxu0 0
      %615 = vmatpush1.bf16.msra.mxu0 0
      %616 = vmatprep.subr.bf16.mxu0 0
      %617 = vmatpush1.bf16.msra.mxu0 0
      %618 = vmatprep.subr.bf16.mxu0 0
      %619 = vmatpush1.bf16.msra.mxu0 0
      %620 = vmatprep.subr.bf16.mxu0 0
      %621 = vmatpush1.bf16.msra.mxu0 0
      %622 = vmatprep.subr.bf16.mxu0 0
      %623 = vmatpush1.bf16.msra.mxu0 0
      %624 = vmatprep.subr.bf16.mxu0 0
      %625 = vmatpush1.bf16.msra.mxu0 0
      %626 = vmatprep.subr.bf16.mxu0 0
      %627 = vmatpush1.bf16.msra.mxu0 0
      %628 = vmatprep.subr.bf16.mxu0 0
      %629 = vmatpush1.bf16.msra.mxu0 0
      %630 = vmatprep.subr.bf16.mxu0 0
      %631 = vmatpush1.bf16.msra.mxu0 0
      %632 = vmatprep.mubr.bf16.mxu0 0
      %633 = vmatmul.mubr.bf16.gmra.mrb[0].mxu0 %v598
      %v634 = vpop.f32.mrb[0].mxu0
      %v635 = vadd.f32 0.0, %v634
      %v636 = vpop.f32.mrb[0].mxu0
      %v637 = vadd.f32 0.0, %v636
      %v638 = vpop.f32.mrb[0].mxu0
      %v639 = vadd.f32 0.0, %v638
      %v640 = vpop.f32.mrb[0].mxu0
      %v641 = vadd.f32 0.0, %v640
      %642 = vdwg.mxu0
      %643 = vmatprep.subr.bf16.mxu0 0
      %644 = vmatpush1.bf16.msra.mxu0 %v593
      %645 = vmatprep.subr.bf16.mxu0 0
      %646 = vmatpush1.bf16.msra.mxu0 0
      %647 = vmatprep.subr.bf16.mxu0 0
      %648 = vmatpush1.bf16.msra.mxu0 0
      %649 = vmatprep.subr.bf16.mxu0 0
      %650 = vmatpush1.bf16.msra.mxu0 0
      %651 = vmatprep.subr.bf16.mxu0 0
      %652 = vmatpush1.bf16.msra.mxu0 0
      %653 = vmatprep.subr.bf16.mxu0 0
      %654 = vmatpush1.bf16.msra.mxu0 0
      %655 = vmatprep.subr.bf16.mxu0 0
      %656 = vmatpush1.bf16.msra.mxu0 0
      %657 = vmatprep.subr.bf16.mxu0 0
      %658 = vmatpush1.bf16.msra.mxu0 0
      %659 = vmatprep.subr.bf16.mxu0 0
      %660 = vmatpush1.bf16.msra.mxu0 0
      %661 = vmatprep.subr.bf16.mxu0 0
      %662 = vmatpush1.bf16.msra.mxu0 0
      %663 = vmatprep.subr.bf16.mxu0 0
      %664 = vmatpush1.bf16.msra.mxu0 0
      %665 = vmatprep.subr.bf16.mxu0 0
      %666 = vmatpush1.bf16.msra.mxu0 0
      %667 = vmatprep.subr.bf16.mxu0 0
      %668 = vmatpush1.bf16.msra.mxu0 0
      %669 = vmatprep.subr.bf16.mxu0 0
      %670 = vmatpush1.bf16.msra.mxu0 0
      %671 = vmatprep.subr.bf16.mxu0 0
      %672 = vmatpush1.bf16.msra.mxu0 0
      %673 = vmatprep.subr.bf16.mxu0 0
      %674 = vmatpush1.bf16.msra.mxu0 0
      %675 = vmatprep.mubr.bf16.mxu0 0
      %676 = vmatmul.mubr.bf16.gmra.mrb[0].mxu0 %v598
      %v677 = vpop.f32.mrb[0].mxu0
      %v678 = vadd.f32 0.0, %v677
      %v679 = vpop.f32.mrb[0].mxu0
      %v680 = vpop.f32.mrb[0].mxu0
      %v681 = vadd.f32 0.0, %v680
      %v682 = vpop.f32.mrb[0].mxu0
      %683 = vdwg.mxu0
      %v684 = vadd.f32 %v568, %v635
      %v685 = vadd.f32 %v569, %v637
      %v686 = vadd.f32 %v570, %v678
      %v687 = vadd.f32 %v571, %v639
      %v688 = vadd.f32 %v572, %v641
      %v689 = vadd.f32 %v573, %v681
      %s690 = scalar_lea.vmem %s1, 32
      %v691 = vld [vmem:[%s690] sm:$0xf]
      %v692 = vld [vmem:[%s690 + $0x4] sm:$0xf]
      %v695 = vunpack.c.l.b16 %v691
      %v696 = vunpack.c.l.b16 %v692
      %v697 = vpack.c.b16 %v696, %v695
      %698 = vrot.lane.b32.xlu0 %v245, 103
      %v699 = vpop.permute.xlu0 %698
      %700 = vrot.lane.b32.xlu0 %v246, 103
      %v701 = vpop.permute.xlu0 %700
      %702 = vrot.lane.b32.xlu0 %v247, 103
      %v703 = vpop.permute.xlu0 %702
      %704 = vrot.lane.b32.xlu0 %v250, 103
      %v705 = vpop.permute.xlu0 %704
      %vm706 = vcmask 842752
      %v707 = vsel %vm706, %v699, %v701
      %v708 = vsel %vm706, %v701, %v703
      %v709 = vsel %vm706, %v703, %v705
      %v714 = vsel %vm278, %v697, 0
      %716 = vmatprep.subr.bf16.mxu0 %v708
      %717 = vmatpush1.bf16.msra.mxu0 %v707
      %718 = vmatprep.subr.bf16.mxu0 0
      %719 = vmatpush1.bf16.msra.mxu0 0
      %720 = vmatprep.subr.bf16.mxu0 0
      %721 = vmatpush1.bf16.msra.mxu0 0
      %722 = vmatprep.subr.bf16.mxu0 0
      %723 = vmatpush1.bf16.msra.mxu0 0
      %724 = vmatprep.subr.bf16.mxu0 0
      %725 = vmatpush1.bf16.msra.mxu0 0
      %726 = vmatprep.subr.bf16.mxu0 0
      %727 = vmatpush1.bf16.msra.mxu0 0
      %728 = vmatprep.subr.bf16.mxu0 0
      %729 = vmatpush1.bf16.msra.mxu0 0
      %730 = vmatprep.subr.bf16.mxu0 0
      %731 = vmatpush1.bf16.msra.mxu0 0
      %732 = vmatprep.subr.bf16.mxu0 0
      %733 = vmatpush1.bf16.msra.mxu0 0
      %734 = vmatprep.subr.bf16.mxu0 0
      %735 = vmatpush1.bf16.msra.mxu0 0
      %736 = vmatprep.subr.bf16.mxu0 0
      %737 = vmatpush1.bf16.msra.mxu0 0
      %738 = vmatprep.subr.bf16.mxu0 0
      %739 = vmatpush1.bf16.msra.mxu0 0
      %740 = vmatprep.subr.bf16.mxu0 0
      %741 = vmatpush1.bf16.msra.mxu0 0
      %742 = vmatprep.subr.bf16.mxu0 0
      %743 = vmatpush1.bf16.msra.mxu0 0
      %744 = vmatprep.subr.bf16.mxu0 0
      %745 = vmatpush1.bf16.msra.mxu0 0
      %746 = vmatprep.subr.bf16.mxu0 0
      %747 = vmatpush1.bf16.msra.mxu0 0
      %748 = vmatprep.mubr.bf16.mxu0 0
      %749 = vmatmul.mubr.bf16.gmra.mrb[0].mxu0 %v714
      %v750 = vpop.f32.mrb[0].mxu0
      %v751 = vadd.f32 0.0, %v750
      %v752 = vpop.f32.mrb[0].mxu0
      %v753 = vadd.f32 0.0, %v752
      %v754 = vpop.f32.mrb[0].mxu0
      %v755 = vadd.f32 0.0, %v754
      %v756 = vpop.f32.mrb[0].mxu0
      %v757 = vadd.f32 0.0, %v756
      %758 = vdwg.mxu0
      %759 = vmatprep.subr.bf16.mxu0 0
      %760 = vmatpush1.bf16.msra.mxu0 %v709
      %761 = vmatprep.subr.bf16.mxu0 0
      %762 = vmatpush1.bf16.msra.mxu0 0
      %763 = vmatprep.subr.bf16.mxu0 0
      %764 = vmatpush1.bf16.msra.mxu0 0
      %765 = vmatprep.subr.bf16.mxu0 0
      %766 = vmatpush1.bf16.msra.mxu0 0
      %767 = vmatprep.subr.bf16.mxu0 0
      %768 = vmatpush1.bf16.msra.mxu0 0
      %769 = vmatprep.subr.bf16.mxu0 0
      %770 = vmatpush1.bf16.msra.mxu0 0
      %771 = vmatprep.subr.bf16.mxu0 0
      %772 = vmatpush1.bf16.msra.mxu0 0
      %773 = vmatprep.subr.bf16.mxu0 0
      %774 = vmatpush1.bf16.msra.mxu0 0
      %775 = vmatprep.subr.bf16.mxu0 0
      %776 = vmatpush1.bf16.msra.mxu0 0
      %777 = vmatprep.subr.bf16.mxu0 0
      %778 = vmatpush1.bf16.msra.mxu0 0
      %779 = vmatprep.subr.bf16.mxu0 0
      %780 = vmatpush1.bf16.msra.mxu0 0
      %781 = vmatprep.subr.bf16.mxu0 0
      %782 = vmatpush1.bf16.msra.mxu0 0
      %783 = vmatprep.subr.bf16.mxu0 0
      %784 = vmatpush1.bf16.msra.mxu0 0
      %785 = vmatprep.subr.bf16.mxu0 0
      %786 = vmatpush1.bf16.msra.mxu0 0
      %787 = vmatprep.subr.bf16.mxu0 0
      %788 = vmatpush1.bf16.msra.mxu0 0
      %789 = vmatprep.subr.bf16.mxu0 0
      %790 = vmatpush1.bf16.msra.mxu0 0
      %791 = vmatprep.mubr.bf16.mxu0 0
      %792 = vmatmul.mubr.bf16.gmra.mrb[0].mxu0 %v714
      %v793 = vpop.f32.mrb[0].mxu0
      %v794 = vadd.f32 0.0, %v793
      %v795 = vpop.f32.mrb[0].mxu0
      %v796 = vpop.f32.mrb[0].mxu0
      %v797 = vadd.f32 0.0, %v796
      %v798 = vpop.f32.mrb[0].mxu0
      %799 = vdwg.mxu0
      %v800 = vadd.f32 %v684, %v751
      %v801 = vadd.f32 %v685, %v753
      %v802 = vadd.f32 %v686, %v794
      %v803 = vadd.f32 %v687, %v755
      %v804 = vadd.f32 %v688, %v757
      %v805 = vadd.f32 %v689, %v797
      %s806 = scalar_lea.vmem %s1, 40
      %v807 = vld [vmem:[%s806] sm:$0xf]
      %v808 = vld [vmem:[%s806 + $0x4] sm:$0xf]
      %v811 = vunpack.c.l.b16 %v807
      %v812 = vunpack.c.l.b16 %v808
      %v813 = vpack.c.b16 %v812, %v811
      %814 = vrot.lane.b32.xlu0 %v245, 102
      %v815 = vpop.permute.xlu0 %814
      %816 = vrot.lane.b32.xlu0 %v246, 102
      %v817 = vpop.permute.xlu0 %816
      %818 = vrot.lane.b32.xlu0 %v247, 102
      %v819 = vpop.permute.xlu0 %818
      %820 = vrot.lane.b32.xlu0 %v250, 102
      %v821 = vpop.permute.xlu0 %820
      %vm822 = vcmask 834560
      %v823 = vsel %vm822, %v815, %v817
      %v824 = vsel %vm822, %v817, %v819
      %v825 = vsel %vm822, %v819, %v821
      %v830 = vsel %vm278, %v813, 0
      %832 = vmatprep.subr.bf16.mxu0 %v824
      %833 = vmatpush1.bf16.msra.mxu0 %v823
      %834 = vmatprep.subr.bf16.mxu0 0
      %835 = vmatpush1.bf16.msra.mxu0 0
      %836 = vmatprep.subr.bf16.mxu0 0
      %837 = vmatpush1.bf16.msra.mxu0 0
      %838 = vmatprep.subr.bf16.mxu0 0
      %839 = vmatpush1.bf16.msra.mxu0 0
      %840 = vmatprep.subr.bf16.mxu0 0
      %841 = vmatpush1.bf16.msra.mxu0 0
      %842 = vmatprep.subr.bf16.mxu0 0
      %843 = vmatpush1.bf16.msra.mxu0 0
      %844 = vmatprep.subr.bf16.mxu0 0
      %845 = vmatpush1.bf16.msra.mxu0 0
      %846 = vmatprep.subr.bf16.mxu0 0
      %847 = vmatpush1.bf16.msra.mxu0 0
      %848 = vmatprep.subr.bf16.mxu0 0
      %849 = vmatpush1.bf16.msra.mxu0 0
      %850 = vmatprep.subr.bf16.mxu0 0
      %851 = vmatpush1.bf16.msra.mxu0 0
      %852 = vmatprep.subr.bf16.mxu0 0
      %853 = vmatpush1.bf16.msra.mxu0 0
      %854 = vmatprep.subr.bf16.mxu0 0
      %855 = vmatpush1.bf16.msra.mxu0 0
      %856 = vmatprep.subr.bf16.mxu0 0
      %857 = vmatpush1.bf16.msra.mxu0 0
      %858 = vmatprep.subr.bf16.mxu0 0
      %859 = vmatpush1.bf16.msra.mxu0 0
      %860 = vmatprep.subr.bf16.mxu0 0
      %861 = vmatpush1.bf16.msra.mxu0 0
      %862 = vmatprep.subr.bf16.mxu0 0
      %863 = vmatpush1.bf16.msra.mxu0 0
      %864 = vmatprep.mubr.bf16.mxu0 0
      %865 = vmatmul.mubr.bf16.gmra.mrb[0].mxu0 %v830
      %v866 = vpop.f32.mrb[0].mxu0
      %v867 = vadd.f32 0.0, %v866
      %v868 = vpop.f32.mrb[0].mxu0
      %v869 = vadd.f32 0.0, %v868
      %v870 = vpop.f32.mrb[0].mxu0
      %v871 = vadd.f32 0.0, %v870
      %v872 = vpop.f32.mrb[0].mxu0
      %v873 = vadd.f32 0.0, %v872
      %874 = vdwg.mxu0
      %875 = vmatprep.subr.bf16.mxu0 0
      %876 = vmatpush1.bf16.msra.mxu0 %v825
      %877 = vmatprep.subr.bf16.mxu0 0
      %878 = vmatpush1.bf16.msra.mxu0 0
      %879 = vmatprep.subr.bf16.mxu0 0
      %880 = vmatpush1.bf16.msra.mxu0 0
      %881 = vmatprep.subr.bf16.mxu0 0
      %882 = vmatpush1.bf16.msra.mxu0 0
      %883 = vmatprep.subr.bf16.mxu0 0
      %884 = vmatpush1.bf16.msra.mxu0 0
      %885 = vmatprep.subr.bf16.mxu0 0
      %886 = vmatpush1.bf16.msra.mxu0 0
      %887 = vmatprep.subr.bf16.mxu0 0
      %888 = vmatpush1.bf16.msra.mxu0 0
      %889 = vmatprep.subr.bf16.mxu0 0
      %890 = vmatpush1.bf16.msra.mxu0 0
      %891 = vmatprep.subr.bf16.mxu0 0
      %892 = vmatpush1.bf16.msra.mxu0 0
      %893 = vmatprep.subr.bf16.mxu0 0
      %894 = vmatpush1.bf16.msra.mxu0 0
      %895 = vmatprep.subr.bf16.mxu0 0
      %896 = vmatpush1.bf16.msra.mxu0 0
      %897 = vmatprep.subr.bf16.mxu0 0
      %898 = vmatpush1.bf16.msra.mxu0 0
      %899 = vmatprep.subr.bf16.mxu0 0
      %900 = vmatpush1.bf16.msra.mxu0 0
      %901 = vmatprep.subr.bf16.mxu0 0
      %902 = vmatpush1.bf16.msra.mxu0 0
      %903 = vmatprep.subr.bf16.mxu0 0
      %904 = vmatpush1.bf16.msra.mxu0 0
      %905 = vmatprep.subr.bf16.mxu0 0
      %906 = vmatpush1.bf16.msra.mxu0 0
      %907 = vmatprep.mubr.bf16.mxu0 0
      %908 = vmatmul.mubr.bf16.gmra.mrb[0].mxu0 %v830
      %v909 = vpop.f32.mrb[0].mxu0
      %v910 = vadd.f32 0.0, %v909
      %v911 = vpop.f32.mrb[0].mxu0
      %v912 = vpop.f32.mrb[0].mxu0
      %v913 = vadd.f32 0.0, %v912
      %v914 = vpop.f32.mrb[0].mxu0
      %915 = vdwg.mxu0
      %v916 = vadd.f32 %v800, %v867
      %v917 = vadd.f32 %v801, %v869
      %v918 = vadd.f32 %v802, %v910
      %v919 = vadd.f32 %v803, %v871
      %v920 = vadd.f32 %v804, %v873
      %v921 = vadd.f32 %v805, %v913
      %s922 = scalar_lea.vmem %s1, 48
      %v923 = vld [vmem:[%s922] sm:$0xf]
      %v924 = vld [vmem:[%s922 + $0x4] sm:$0xf]
      %v927 = vunpack.c.l.b16 %v923
      %v928 = vunpack.c.l.b16 %v924
      %v929 = vpack.c.b16 %v928, %v927
      %930 = vrot.lane.b32.xlu0 %v245, 80
      %v931 = vpop.permute.xlu0 %930
      %932 = vrot.lane.b32.xlu0 %v246, 80
      %v933 = vpop.permute.xlu0 %932
      %934 = vrot.lane.b32.xlu0 %v247, 80
      %v935 = vpop.permute.xlu0 %934
      %936 = vrot.lane.b32.xlu0 %v250, 80
      %v937 = vpop.permute.xlu0 %936
      %vm938 = vcmask 654336
      %v939 = vsel %vm938, %v931, %v933
      %v940 = vsel %vm938, %v933, %v935
      %v941 = vsel %vm938, %v935, %v937
      %v946 = vsel %vm278, %v929, 0
      %948 = vmatprep.subr.bf16.mxu0 %v940
      %949 = vmatpush1.bf16.msra.mxu0 %v939
      %950 = vmatprep.subr.bf16.mxu0 0
      %951 = vmatpush1.bf16.msra.mxu0 0
      %952 = vmatprep.subr.bf16.mxu0 0
      %953 = vmatpush1.bf16.msra.mxu0 0
      %954 = vmatprep.subr.bf16.mxu0 0
      %955 = vmatpush1.bf16.msra.mxu0 0
      %956 = vmatprep.subr.bf16.mxu0 0
      %957 = vmatpush1.bf16.msra.mxu0 0
      %958 = vmatprep.subr.bf16.mxu0 0
      %959 = vmatpush1.bf16.msra.mxu0 0
      %960 = vmatprep.subr.bf16.mxu0 0
      %961 = vmatpush1.bf16.msra.mxu0 0
      %962 = vmatprep.subr.bf16.mxu0 0
      %963 = vmatpush1.bf16.msra.mxu0 0
      %964 = vmatprep.subr.bf16.mxu0 0
      %965 = vmatpush1.bf16.msra.mxu0 0
      %966 = vmatprep.subr.bf16.mxu0 0
      %967 = vmatpush1.bf16.msra.mxu0 0
      %968 = vmatprep.subr.bf16.mxu0 0
      %969 = vmatpush1.bf16.msra.mxu0 0
      %970 = vmatprep.subr.bf16.mxu0 0
      %971 = vmatpush1.bf16.msra.mxu0 0
      %972 = vmatprep.subr.bf16.mxu0 0
      %973 = vmatpush1.bf16.msra.mxu0 0
      %974 = vmatprep.subr.bf16.mxu0 0
      %975 = vmatpush1.bf16.msra.mxu0 0
      %976 = vmatprep.subr.bf16.mxu0 0
      %977 = vmatpush1.bf16.msra.mxu0 0
      %978 = vmatprep.subr.bf16.mxu0 0
      %979 = vmatpush1.bf16.msra.mxu0 0
      %980 = vmatprep.mubr.bf16.mxu0 0
      %981 = vmatmul.mubr.bf16.gmra.mrb[0].mxu0 %v946
      %v982 = vpop.f32.mrb[0].mxu0
      %v983 = vadd.f32 0.0, %v982
      %v984 = vpop.f32.mrb[0].mxu0
      %v985 = vadd.f32 0.0, %v984
      %v986 = vpop.f32.mrb[0].mxu0
      %v987 = vadd.f32 0.0, %v986
      %v988 = vpop.f32.mrb[0].mxu0
      %v989 = vadd.f32 0.0, %v988
      %990 = vdwg.mxu0
      %991 = vmatprep.subr.bf16.mxu0 0
      %992 = vmatpush1.bf16.msra.mxu0 %v941
      %993 = vmatprep.subr.bf16.mxu0 0
      %994 = vmatpush1.bf16.msra.mxu0 0
      %995 = vmatprep.subr.bf16.mxu0 0
      %996 = vmatpush1.bf16.msra.mxu0 0
      %997 = vmatprep.subr.bf16.mxu0 0
      %998 = vmatpush1.bf16.msra.mxu0 0
      %999 = vmatprep.subr.bf16.mxu0 0
      %1000 = vmatpush1.bf16.msra.mxu0 0
      %1001 = vmatprep.subr.bf16.mxu0 0
      %1002 = vmatpush1.bf16.msra.mxu0 0
      %1003 = vmatprep.subr.bf16.mxu0 0
      %1004 = vmatpush1.bf16.msra.mxu0 0
      %1005 = vmatprep.subr.bf16.mxu0 0
      %1006 = vmatpush1.bf16.msra.mxu0 0
      %1007 = vmatprep.subr.bf16.mxu0 0
      %1008 = vmatpush1.bf16.msra.mxu0 0
      %1009 = vmatprep.subr.bf16.mxu0 0
      %1010 = vmatpush1.bf16.msra.mxu0 0
      %1011 = vmatprep.subr.bf16.mxu0 0
      %1012 = vmatpush1.bf16.msra.mxu0 0
      %1013 = vmatprep.subr.bf16.mxu0 0
      %1014 = vmatpush1.bf16.msra.mxu0 0
      %1015 = vmatprep.subr.bf16.mxu0 0
      %1016 = vmatpush1.bf16.msra.mxu0 0
      %1017 = vmatprep.subr.bf16.mxu0 0
      %1018 = vmatpush1.bf16.msra.mxu0 0
      %1019 = vmatprep.subr.bf16.mxu0 0
      %1020 = vmatpush1.bf16.msra.mxu0 0
      %1021 = vmatprep.subr.bf16.mxu0 0
      %1022 = vmatpush1.bf16.msra.mxu0 0
      %1023 = vmatprep.mubr.bf16.mxu0 0
      %1024 = vmatmul.mubr.bf16.gmra.mrb[0].mxu0 %v946
      %v1025 = vpop.f32.mrb[0].mxu0
      %v1026 = vadd.f32 0.0, %v1025
      %v1027 = vpop.f32.mrb[0].mxu0
      %v1028 = vpop.f32.mrb[0].mxu0
      %v1029 = vadd.f32 0.0, %v1028
      %v1030 = vpop.f32.mrb[0].mxu0
      %1031 = vdwg.mxu0
      %v1032 = vadd.f32 %v916, %v983
      %v1033 = vadd.f32 %v917, %v985
      %v1034 = vadd.f32 %v918, %v1026
      %v1035 = vadd.f32 %v919, %v987
      %v1036 = vadd.f32 %v920, %v989
      %v1037 = vadd.f32 %v921, %v1029
      %s1038 = scalar_lea.vmem %s1, 56
      %v1039 = vld [vmem:[%s1038] sm:$0xf]
      %v1040 = vld [vmem:[%s1038 + $0x4] sm:$0xf]
      %v1043 = vunpack.c.l.b16 %v1039
      %v1044 = vunpack.c.l.b16 %v1040
      %v1045 = vpack.c.b16 %v1044, %v1043
      %1046 = vrot.lane.b32.xlu0 %v245, 79
      %v1047 = vpop.permute.xlu0 %1046
      %1048 = vrot.lane.b32.xlu0 %v246, 79
      %v1049 = vpop.permute.xlu0 %1048
      %1050 = vrot.lane.b32.xlu0 %v247, 79
      %v1051 = vpop.permute.xlu0 %1050
      %1052 = vrot.lane.b32.xlu0 %v250, 79
      %v1053 = vpop.permute.xlu0 %1052
      %vm1054 = vcmask 646144
      %v1055 = vsel %vm1054, %v1047, %v1049
      %v1056 = vsel %vm1054, %v1049, %v1051
      %v1057 = vsel %vm1054, %v1051, %v1053
      %v1062 = vsel %vm278, %v1045, 0
      %1064 = vmatprep.subr.bf16.mxu0 %v1056
      %1065 = vmatpush1.bf16.msra.mxu0 %v1055
      %1066 = vmatprep.subr.bf16.mxu0 0
      %1067 = vmatpush1.bf16.msra.mxu0 0
      %1068 = vmatprep.subr.bf16.mxu0 0
      %1069 = vmatpush1.bf16.msra.mxu0 0
      %1070 = vmatprep.subr.bf16.mxu0 0
      %1071 = vmatpush1.bf16.msra.mxu0 0
      %1072 = vmatprep.subr.bf16.mxu0 0
      %1073 = vmatpush1.bf16.msra.mxu0 0
      %1074 = vmatprep.subr.bf16.mxu0 0
      %1075 = vmatpush1.bf16.msra.mxu0 0
      %1076 = vmatprep.subr.bf16.mxu0 0
      %1077 = vmatpush1.bf16.msra.mxu0 0
      %1078 = vmatprep.subr.bf16.mxu0 0
      %1079 = vmatpush1.bf16.msra.mxu0 0
      %1080 = vmatprep.subr.bf16.mxu0 0
      %1081 = vmatpush1.bf16.msra.mxu0 0
      %1082 = vmatprep.subr.bf16.mxu0 0
      %1083 = vmatpush1.bf16.msra.mxu0 0
      %1084 = vmatprep.subr.bf16.mxu0 0
      %1085 = vmatpush1.bf16.msra.mxu0 0
      %1086 = vmatprep.subr.bf16.mxu0 0
      %1087 = vmatpush1.bf16.msra.mxu0 0
      %1088 = vmatprep.subr.bf16.mxu0 0
      %1089 = vmatpush1.bf16.msra.mxu0 0
      %1090 = vmatprep.subr.bf16.mxu0 0
      %1091 = vmatpush1.bf16.msra.mxu0 0
      %1092 = vmatprep.subr.bf16.mxu0 0
      %1093 = vmatpush1.bf16.msra.mxu0 0
      %1094 = vmatprep.subr.bf16.mxu0 0
      %1095 = vmatpush1.bf16.msra.mxu0 0
      %1096 = vmatprep.mubr.bf16.mxu0 0
      %1097 = vmatmul.mubr.bf16.gmra.mrb[0].mxu0 %v1062
      %v1098 = vpop.f32.mrb[0].mxu0
      %v1099 = vadd.f32 0.0, %v1098
      %v1100 = vpop.f32.mrb[0].mxu0
      %v1101 = vadd.f32 0.0, %v1100
      %v1102 = vpop.f32.mrb[0].mxu0
      %v1103 = vadd.f32 0.0, %v1102
      %v1104 = vpop.f32.mrb[0].mxu0
      %v1105 = vadd.f32 0.0, %v1104
      %1106 = vdwg.mxu0
      %1107 = vmatprep.subr.bf16.mxu0 0
      %1108 = vmatpush1.bf16.msra.mxu0 %v1057
      %1109 = vmatprep.subr.bf16.mxu0 0
      %1110 = vmatpush1.bf16.msra.mxu0 0
      %1111 = vmatprep.subr.bf16.mxu0 0
      %1112 = vmatpush1.bf16.msra.mxu0 0
      %1113 = vmatprep.subr.bf16.mxu0 0
      %1114 = vmatpush1.bf16.msra.mxu0 0
      %1115 = vmatprep.subr.bf16.mxu0 0
      %1116 = vmatpush1.bf16.msra.mxu0 0
      %1117 = vmatprep.subr.bf16.mxu0 0
      %1118 = vmatpush1.bf16.msra.mxu0 0
      %1119 = vmatprep.subr.bf16.mxu0 0
      %1120 = vmatpush1.bf16.msra.mxu0 0
      %1121 = vmatprep.subr.bf16.mxu0 0
      %1122 = vmatpush1.bf16.msra.mxu0 0
      %1123 = vmatprep.subr.bf16.mxu0 0
      %1124 = vmatpush1.bf16.msra.mxu0 0
      %1125 = vmatprep.subr.bf16.mxu0 0
      %1126 = vmatpush1.bf16.msra.mxu0 0
      %1127 = vmatprep.subr.bf16.mxu0 0
      %1128 = vmatpush1.bf16.msra.mxu0 0
      %1129 = vmatprep.subr.bf16.mxu0 0
      %1130 = vmatpush1.bf16.msra.mxu0 0
      %1131 = vmatprep.subr.bf16.mxu0 0
      %1132 = vmatpush1.bf16.msra.mxu0 0
      %1133 = vmatprep.subr.bf16.mxu0 0
      %1134 = vmatpush1.bf16.msra.mxu0 0
      %1135 = vmatprep.subr.bf16.mxu0 0
      %1136 = vmatpush1.bf16.msra.mxu0 0
      %1137 = vmatprep.subr.bf16.mxu0 0
      %1138 = vmatpush1.bf16.msra.mxu0 0
      %1139 = vmatprep.mubr.bf16.mxu0 0
      %1140 = vmatmul.mubr.bf16.gmra.mrb[0].mxu0 %v1062
      %v1141 = vpop.f32.mrb[0].mxu0
      %v1142 = vadd.f32 0.0, %v1141
      %v1143 = vpop.f32.mrb[0].mxu0
      %v1144 = vpop.f32.mrb[0].mxu0
      %v1145 = vadd.f32 0.0, %v1144
      %v1146 = vpop.f32.mrb[0].mxu0
      %1147 = vdwg.mxu0
      %v1148 = vadd.f32 %v1032, %v1099
      %v1149 = vadd.f32 %v1033, %v1101
      %v1150 = vadd.f32 %v1034, %v1142
      %v1151 = vadd.f32 %v1035, %v1103
      %v1152 = vadd.f32 %v1036, %v1105
      %v1153 = vadd.f32 %v1037, %v1145
      %s1154 = scalar_lea.vmem %s1, 64
      %v1155 = vld [vmem:[%s1154] sm:$0xf]
      %v1156 = vld [vmem:[%s1154 + $0x4] sm:$0xf]
      %v1159 = vunpack.c.l.b16 %v1155
      %v1160 = vunpack.c.l.b16 %v1156
      %v1161 = vpack.c.b16 %v1160, %v1159
      %1162 = vrot.lane.b32.xlu0 %v245, 78
      %v1163 = vpop.permute.xlu0 %1162
      %1164 = vrot.lane.b32.xlu0 %v246, 78
      %v1165 = vpop.permute.xlu0 %1164
      %1166 = vrot.lane.b32.xlu0 %v247, 78
      %v1167 = vpop.permute.xlu0 %1166
      %1168 = vrot.lane.b32.xlu0 %v250, 78
      %v1169 = vpop.permute.xlu0 %1168
      %vm1170 = vcmask 637952
      %v1171 = vsel %vm1170, %v1163, %v1165
      %v1172 = vsel %vm1170, %v1165, %v1167
      %v1173 = vsel %vm1170, %v1167, %v1169
      %v1178 = vsel %vm278, %v1161, 0
      %1180 = vmatprep.subr.bf16.mxu0 %v1172
      %1181 = vmatpush1.bf16.msra.mxu0 %v1171
      %1182 = vmatprep.subr.bf16.mxu0 0
      %1183 = vmatpush1.bf16.msra.mxu0 0
      %1184 = vmatprep.subr.bf16.mxu0 0
      %1185 = vmatpush1.bf16.msra.mxu0 0
      %1186 = vmatprep.subr.bf16.mxu0 0
      %1187 = vmatpush1.bf16.msra.mxu0 0
      %1188 = vmatprep.subr.bf16.mxu0 0
      %1189 = vmatpush1.bf16.msra.mxu0 0
      %1190 = vmatprep.subr.bf16.mxu0 0
      %1191 = vmatpush1.bf16.msra.mxu0 0
      %1192 = vmatprep.subr.bf16.mxu0 0
      %1193 = vmatpush1.bf16.msra.mxu0 0
      %1194 = vmatprep.subr.bf16.mxu0 0
      %1195 = vmatpush1.bf16.msra.mxu0 0
      %1196 = vmatprep.subr.bf16.mxu0 0
      %1197 = vmatpush1.bf16.msra.mxu0 0
      %1198 = vmatprep.subr.bf16.mxu0 0
      %1199 = vmatpush1.bf16.msra.mxu0 0
      %1200 = vmatprep.subr.bf16.mxu0 0
      %1201 = vmatpush1.bf16.msra.mxu0 0
      %1202 = vmatprep.subr.bf16.mxu0 0
      %1203 = vmatpush1.bf16.msra.mxu0 0
      %1204 = vmatprep.subr.bf16.mxu0 0
      %1205 = vmatpush1.bf16.msra.mxu0 0
      %1206 = vmatprep.subr.bf16.mxu0 0
      %1207 = vmatpush1.bf16.msra.mxu0 0
      %1208 = vmatprep.subr.bf16.mxu0 0
      %1209 = vmatpush1.bf16.msra.mxu0 0
      %1210 = vmatprep.subr.bf16.mxu0 0
      %1211 = vmatpush1.bf16.msra.mxu0 0
      %1212 = vmatprep.mubr.bf16.mxu0 0
      %1213 = vmatmul.mubr.bf16.gmra.mrb[0].mxu0 %v1178
      %v1214 = vpop.f32.mrb[0].mxu0
      %v1215 = vadd.f32 0.0, %v1214
      %v1216 = vpop.f32.mrb[0].mxu0
      %v1217 = vadd.f32 0.0, %v1216
      %v1218 = vpop.f32.mrb[0].mxu0
      %v1219 = vadd.f32 0.0, %v1218
      %v1220 = vpop.f32.mrb[0].mxu0
      %v1221 = vadd.f32 0.0, %v1220
      %1222 = vdwg.mxu0
      %1223 = vmatprep.subr.bf16.mxu0 0
      %1224 = vmatpush1.bf16.msra.mxu0 %v1173
      %1225 = vmatprep.subr.bf16.mxu0 0
      %1226 = vmatpush1.bf16.msra.mxu0 0
      %1227 = vmatprep.subr.bf16.mxu0 0
      %1228 = vmatpush1.bf16.msra.mxu0 0
      %1229 = vmatprep.subr.bf16.mxu0 0
      %1230 = vmatpush1.bf16.msra.mxu0 0
      %1231 = vmatprep.subr.bf16.mxu0 0
      %1232 = vmatpush1.bf16.msra.mxu0 0
      %1233 = vmatprep.subr.bf16.mxu0 0
      %1234 = vmatpush1.bf16.msra.mxu0 0
      %1235 = vmatprep.subr.bf16.mxu0 0
      %1236 = vmatpush1.bf16.msra.mxu0 0
      %1237 = vmatprep.subr.bf16.mxu0 0
      %1238 = vmatpush1.bf16.msra.mxu0 0
      %1239 = vmatprep.subr.bf16.mxu0 0
      %1240 = vmatpush1.bf16.msra.mxu0 0
      %1241 = vmatprep.subr.bf16.mxu0 0
      %1242 = vmatpush1.bf16.msra.mxu0 0
      %1243 = vmatprep.subr.bf16.mxu0 0
      %1244 = vmatpush1.bf16.msra.mxu0 0
      %1245 = vmatprep.subr.bf16.mxu0 0
      %1246 = vmatpush1.bf16.msra.mxu0 0
      %1247 = vmatprep.subr.bf16.mxu0 0
      %1248 = vmatpush1.bf16.msra.mxu0 0
      %1249 = vmatprep.subr.bf16.mxu0 0
      %1250 = vmatpush1.bf16.msra.mxu0 0
      %1251 = vmatprep.subr.bf16.mxu0 0
      %1252 = vmatpush1.bf16.msra.mxu0 0
      %1253 = vmatprep.subr.bf16.mxu0 0
      %1254 = vmatpush1.bf16.msra.mxu0 0
      %1255 = vmatprep.mubr.bf16.mxu0 0
      %1256 = vmatmul.mubr.bf16.gmra.mrb[0].mxu0 %v1178
      %v1257 = vpop.f32.mrb[0].mxu0
      %v1258 = vadd.f32 0.0, %v1257
      %v1259 = vpop.f32.mrb[0].mxu0
      %v1260 = vpop.f32.mrb[0].mxu0
      %v1261 = vadd.f32 0.0, %v1260
      %v1262 = vpop.f32.mrb[0].mxu0
      %1263 = vdwg.mxu0
      %v1264 = vadd.f32 %v1148, %v1215
      %v1265 = vadd.f32 %v1149, %v1217
      %v1266 = vadd.f32 %v1150, %v1258
      %v1267 = vadd.f32 %v1151, %v1219
      %v1268 = vadd.f32 %v1152, %v1221
      %v1269 = vadd.f32 %v1153, %v1261
      %v1270 = vld [vmem:[%s3] sm:$0xff]
      %v1271 = vld [vmem:[%s3 + $0x8] sm:$0xff]
      %1273 = vset.pattern.permute.xlu0 0
      %1274 = vperm.xlu0 %1273, %v1270
      %v1275 = vpop.permute.xlu0 %1274
      %1278 = vset.pattern.permute.xlu0 0
      %1279 = vperm.xlu0 %1278, %v1271
      %v1280 = vpop.permute.xlu0 %1279
      %v1282 = vadd.f32 %v1264, %v1275
      %v1283 = vadd.f32 %v1265, %v1275
      %v1284 = vadd.f32 %v1266, %v1275
      %v1285 = vadd.f32 %v1267, %v1280
      %v1286 = vadd.f32 %v1268, %v1280
      %v1287 = vadd.f32 %v1269, %v1280
      %v1288 = vmax.f32 %v1282, 0.0
      %v1289 = vmax.f32 %v1283, 0.0
      %v1290 = vmax.f32 %v1284, 0.0
      %v1291 = vmax.f32 %v1285, 0.0
      %v1292 = vmax.f32 %v1286, 0.0
      %v1293 = vmax.f32 %v1287, 0.0
      %v1294 = vld [vmem:[%s4] sm:$0x7]
      %v1296 = vlaneseq
      %v1297 = vshrl.u32 %v1296, 7
      %v1298 = vsub.s32 0, %v1297
      %v1299 = vrot.slane %v1294, %v1298
      %v1300 = vlaneseq
      %v1301 = vshrl.u32 %v1300, 7
      %v1302 = vsub.s32 1, %v1301
      %v1303 = vrot.slane %v1294, %v1302
      %v1304 = vlaneseq
      %v1305 = vshrl.u32 %v1304, 7
      %v1306 = vsub.s32 2, %v1305
      %v1307 = vrot.slane %v1294, %v1306
      %v1311 = vmul.f32 %v1288, %v1299
      %v1312 = vmul.f32 %v1289, %v1303
      %v1313 = vmul.f32 %v1290, %v1307
      %v1314 = vmul.f32 %v1291, %v1299
      %v1315 = vmul.f32 %v1292, %v1303
      %v1316 = vmul.f32 %v1293, %v1307
      %v1317 = vpack.c.bf16 %v1314, %v1311
      %v1318 = vpack.c.bf16 %v1315, %v1312
      %v1319 = vpack.c.bf16 %v1316, %v1313
      %1320 = vst [vmem:[#allocation3 + $0x8] sm:$0xff] %v1317
      %1321 = vst [vmem:[#allocation3 + $0x10] sm:$0xff] %v1318
      %1322 = vst [vmem:[#allocation3 + $0x18] sm:$0xff] %v1319
      %v1323 = vld [vmem:[#allocation3] sm:$0xff]
      %v1324 = vld [vmem:[#allocation3 + $0x8] sm:$0xff]
      %v1325 = vld [vmem:[#allocation3 + $0x10] sm:$0xff]
      %v1326 = vld [vmem:[#allocation3 + $0x18] sm:$0xff]
      %v1327 = vld [vmem:[%s2] sm:$0xf]
      %v1328 = vld [vmem:[%s2 + $0x4] sm:$0xf]
      %s1329 = scalar_lea.vmem %s2, 8
      %v1330 = vld [vmem:[%s1329] sm:$0xf]
      %v1331 = vld [vmem:[%s1329 + $0x4] sm:$0xf]
      %v1334 = vunpack.c.l.b16 %v1330
      %v1335 = vunpack.c.l.b16 %v1331
      %v1336 = vpack.c.b16 %v1335, %v1334
      %1341 = vrot.lane.b32.xlu0 %v1323, 24
      %v1342 = vpop.permute.xlu0 %1341
      %1343 = vrot.lane.b32.xlu0 %v1324, 24
      %v1344 = vpop.permute.xlu0 %1343
      %1345 = vrot.lane.b32.xlu0 %v1325, 24
      %v1346 = vpop.permute.xlu0 %1345
      %1347 = vrot.lane.b32.xlu0 %v1326, 24
      %v1348 = vpop.permute.xlu0 %1347
      %vm1349 = vcmask 195584
      %v1350 = vsel %vm1349, %v1342, %v1344
      %v1351 = vsel %vm1349, %v1344, %v1346
      %v1352 = vsel %vm1349, %v1346, %v1348
      %v1357 = vsel %vm278, %v1336, 0
      %1359 = vmatprep.subr.bf16.mxu0 %v1351
      %1360 = vmatpush1.bf16.msra.mxu0 %v1350
      %1361 = vmatprep.subr.bf16.mxu0 0
      %1362 = vmatpush1.bf16.msra.mxu0 0
      %1363 = vmatprep.subr.bf16.mxu0 0
      %1364 = vmatpush1.bf16.msra.mxu0 0
      %1365 = vmatprep.subr.bf16.mxu0 0
      %1366 = vmatpush1.bf16.msra.mxu0 0
      %1367 = vmatprep.subr.bf16.mxu0 0
      %1368 = vmatpush1.bf16.msra.mxu0 0
      %1369 = vmatprep.subr.bf16.mxu0 0
      %1370 = vmatpush1.bf16.msra.mxu0 0
      %1371 = vmatprep.subr.bf16.mxu0 0
      %1372 = vmatpush1.bf16.msra.mxu0 0
      %1373 = vmatprep.subr.bf16.mxu0 0
      %1374 = vmatpush1.bf16.msra.mxu0 0
      %1375 = vmatprep.subr.bf16.mxu0 0
      %1376 = vmatpush1.bf16.msra.mxu0 0
      %1377 = vmatprep.subr.bf16.mxu0 0
      %1378 = vmatpush1.bf16.msra.mxu0 0
      %1379 = vmatprep.subr.bf16.mxu0 0
      %1380 = vmatpush1.bf16.msra.mxu0 0
      %1381 = vmatprep.subr.bf16.mxu0 0
      %1382 = vmatpush1.bf16.msra.mxu0 0
      %1383 = vmatprep.subr.bf16.mxu0 0
      %1384 = vmatpush1.bf16.msra.mxu0 0
      %1385 = vmatprep.subr.bf16.mxu0 0
      %1386 = vmatpush1.bf16.msra.mxu0 0
      %1387 = vmatprep.subr.bf16.mxu0 0
      %1388 = vmatpush1.bf16.msra.mxu0 0
      %1389 = vmatprep.subr.bf16.mxu0 0
      %1390 = vmatpush1.bf16.msra.mxu0 0
      %1391 = vmatprep.mubr.bf16.mxu0 0
      %1392 = vmatmul.mubr.bf16.gmra.mrb[0].mxu0 %v1357
      %v1393 = vpop.f32.mrb[0].mxu0
      %v1394 = vadd.f32 0.0, %v1393
      %v1395 = vpop.f32.mrb[0].mxu0
      %v1396 = vadd.f32 0.0, %v1395
      %v1397 = vpop.f32.mrb[0].mxu0
      %v1398 = vadd.f32 0.0, %v1397
      %v1399 = vpop.f32.mrb[0].mxu0
      %v1400 = vadd.f32 0.0, %v1399
      %1401 = vdwg.mxu0
      %1402 = vmatprep.subr.bf16.mxu0 0
      %1403 = vmatpush1.bf16.msra.mxu0 %v1352
      %1404 = vmatprep.subr.bf16.mxu0 0
      %1405 = vmatpush1.bf16.msra.mxu0 0
      %1406 = vmatprep.subr.bf16.mxu0 0
      %1407 = vmatpush1.bf16.msra.mxu0 0
      %1408 = vmatprep.subr.bf16.mxu0 0
      %1409 = vmatpush1.bf16.msra.mxu0 0
      %1410 = vmatprep.subr.bf16.mxu0 0
      %1411 = vmatpush1.bf16.msra.mxu0 0
      %1412 = vmatprep.subr.bf16.mxu0 0
      %1413 = vmatpush1.bf16.msra.mxu0 0
      %1414 = vmatprep.subr.bf16.mxu0 0
      %1415 = vmatpush1.bf16.msra.mxu0 0
      %1416 = vmatprep.subr.bf16.mxu0 0
      %1417 = vmatpush1.bf16.msra.mxu0 0
      %1418 = vmatprep.subr.bf16.mxu0 0
      %1419 = vmatpush1.bf16.msra.mxu0 0
      %1420 = vmatprep.subr.bf16.mxu0 0
      %1421 = vmatpush1.bf16.msra.mxu0 0
      %1422 = vmatprep.subr.bf16.mxu0 0
      %1423 = vmatpush1.bf16.msra.mxu0 0
      %1424 = vmatprep.subr.bf16.mxu0 0
      %1425 = vmatpush1.bf16.msra.mxu0 0
      %1426 = vmatprep.subr.bf16.mxu0 0
      %1427 = vmatpush1.bf16.msra.mxu0 0
      %1428 = vmatprep.subr.bf16.mxu0 0
      %1429 = vmatpush1.bf16.msra.mxu0 0
      %1430 = vmatprep.subr.bf16.mxu0 0
      %1431 = vmatpush1.bf16.msra.mxu0 0
      %1432 = vmatprep.subr.bf16.mxu0 0
      %1433 = vmatpush1.bf16.msra.mxu0 0
      %1434 = vmatprep.mubr.bf16.mxu0 0
      %1435 = vmatmul.mubr.bf16.gmra.mrb[0].mxu0 %v1357
      %v1436 = vpop.f32.mrb[0].mxu0
      %v1437 = vadd.f32 0.0, %v1436
      %v1438 = vpop.f32.mrb[0].mxu0
      %v1439 = vpop.f32.mrb[0].mxu0
      %v1440 = vadd.f32 0.0, %v1439
      %v1441 = vpop.f32.mrb[0].mxu0
      %1442 = vdwg.mxu0
      %v1445 = vunpack.c.l.b16 %v1327
      %v1446 = vunpack.c.l.b16 %v1328
      %v1447 = vpack.c.b16 %v1446, %v1445
      %1448 = vrot.lane.b32.xlu0 %v1323, 25
      %v1449 = vpop.permute.xlu0 %1448
      %1450 = vrot.lane.b32.xlu0 %v1324, 25
      %v1451 = vpop.permute.xlu0 %1450
      %1452 = vrot.lane.b32.xlu0 %v1325, 25
      %v1453 = vpop.permute.xlu0 %1452
      %1454 = vrot.lane.b32.xlu0 %v1326, 25
      %v1455 = vpop.permute.xlu0 %1454
      %vm1456 = vcmask 203776
      %v1457 = vsel %vm1456, %v1449, %v1451
      %v1458 = vsel %vm1456, %v1451, %v1453
      %v1459 = vsel %vm1456, %v1453, %v1455
      %v1464 = vsel %vm278, %v1447, 0
      %1466 = vmatprep.subr.bf16.mxu0 %v1458
      %1467 = vmatpush1.bf16.msra.mxu0 %v1457
      %1468 = vmatprep.subr.bf16.mxu0 0
      %1469 = vmatpush1.bf16.msra.mxu0 0
      %1470 = vmatprep.subr.bf16.mxu0 0
      %1471 = vmatpush1.bf16.msra.mxu0 0
      %1472 = vmatprep.subr.bf16.mxu0 0
      %1473 = vmatpush1.bf16.msra.mxu0 0
      %1474 = vmatprep.subr.bf16.mxu0 0
      %1475 = vmatpush1.bf16.msra.mxu0 0
      %1476 = vmatprep.subr.bf16.mxu0 0
      %1477 = vmatpush1.bf16.msra.mxu0 0
      %1478 = vmatprep.subr.bf16.mxu0 0
      %1479 = vmatpush1.bf16.msra.mxu0 0
      %1480 = vmatprep.subr.bf16.mxu0 0
      %1481 = vmatpush1.bf16.msra.mxu0 0
      %1482 = vmatprep.subr.bf16.mxu0 0
      %1483 = vmatpush1.bf16.msra.mxu0 0
      %1484 = vmatprep.subr.bf16.mxu0 0
      %1485 = vmatpush1.bf16.msra.mxu0 0
      %1486 = vmatprep.subr.bf16.mxu0 0
      %1487 = vmatpush1.bf16.msra.mxu0 0
      %1488 = vmatprep.subr.bf16.mxu0 0
      %1489 = vmatpush1.bf16.msra.mxu0 0
      %1490 = vmatprep.subr.bf16.mxu0 0
      %1491 = vmatpush1.bf16.msra.mxu0 0
      %1492 = vmatprep.subr.bf16.mxu0 0
      %1493 = vmatpush1.bf16.msra.mxu0 0
      %1494 = vmatprep.subr.bf16.mxu0 0
      %1495 = vmatpush1.bf16.msra.mxu0 0
      %1496 = vmatprep.subr.bf16.mxu0 0
      %1497 = vmatpush1.bf16.msra.mxu0 0
      %1498 = vmatprep.mubr.bf16.mxu0 0
      %1499 = vmatmul.mubr.bf16.gmra.mrb[0].mxu0 %v1464
      %v1500 = vpop.f32.mrb[0].mxu0
      %v1501 = vadd.f32 %v1394, %v1500
      %v1502 = vpop.f32.mrb[0].mxu0
      %v1503 = vadd.f32 %v1396, %v1502
      %v1504 = vpop.f32.mrb[0].mxu0
      %v1505 = vadd.f32 %v1398, %v1504
      %v1506 = vpop.f32.mrb[0].mxu0
      %v1507 = vadd.f32 %v1400, %v1506
      %1508 = vdwg.mxu0
      %1509 = vmatprep.subr.bf16.mxu0 0
      %1510 = vmatpush1.bf16.msra.mxu0 %v1459
      %1511 = vmatprep.subr.bf16.mxu0 0
      %1512 = vmatpush1.bf16.msra.mxu0 0
      %1513 = vmatprep.subr.bf16.mxu0 0
      %1514 = vmatpush1.bf16.msra.mxu0 0
      %1515 = vmatprep.subr.bf16.mxu0 0
      %1516 = vmatpush1.bf16.msra.mxu0 0
      %1517 = vmatprep.subr.bf16.mxu0 0
      %1518 = vmatpush1.bf16.msra.mxu0 0
      %1519 = vmatprep.subr.bf16.mxu0 0
      %1520 = vmatpush1.bf16.msra.mxu0 0
      %1521 = vmatprep.subr.bf16.mxu0 0
      %1522 = vmatpush1.bf16.msra.mxu0 0
      %1523 = vmatprep.subr.bf16.mxu0 0
      %1524 = vmatpush1.bf16.msra.mxu0 0
      %1525 = vmatprep.subr.bf16.mxu0 0
      %1526 = vmatpush1.bf16.msra.mxu0 0
      %1527 = vmatprep.subr.bf16.mxu0 0
      %1528 = vmatpush1.bf16.msra.mxu0 0
      %1529 = vmatprep.subr.bf16.mxu0 0
      %1530 = vmatpush1.bf16.msra.mxu0 0
      %1531 = vmatprep.subr.bf16.mxu0 0
      %1532 = vmatpush1.bf16.msra.mxu0 0
      %1533 = vmatprep.subr.bf16.mxu0 0
      %1534 = vmatpush1.bf16.msra.mxu0 0
      %1535 = vmatprep.subr.bf16.mxu0 0
      %1536 = vmatpush1.bf16.msra.mxu0 0
      %1537 = vmatprep.subr.bf16.mxu0 0
      %1538 = vmatpush1.bf16.msra.mxu0 0
      %1539 = vmatprep.subr.bf16.mxu0 0
      %1540 = vmatpush1.bf16.msra.mxu0 0
      %1541 = vmatprep.mubr.bf16.mxu0 0
      %1542 = vmatmul.mubr.bf16.gmra.mrb[0].mxu0 %v1464
      %v1543 = vpop.f32.mrb[0].mxu0
      %v1544 = vadd.f32 %v1437, %v1543
      %v1545 = vpop.f32.mrb[0].mxu0
      %v1546 = vpop.f32.mrb[0].mxu0
      %v1547 = vadd.f32 %v1440, %v1546
      %v1548 = vpop.f32.mrb[0].mxu0
      %1549 = vdwg.mxu0
      %s1550 = scalar_lea.vmem %s2, 16
      %v1551 = vld [vmem:[%s1550] sm:$0xf]
      %v1552 = vld [vmem:[%s1550 + $0x4] sm:$0xf]
      %v1555 = vunpack.c.l.b16 %v1551
      %v1556 = vunpack.c.l.b16 %v1552
      %v1557 = vpack.c.b16 %v1556, %v1555
      %1558 = vrot.lane.b32.xlu0 %v1323, 23
      %v1559 = vpop.permute.xlu0 %1558
      %1560 = vrot.lane.b32.xlu0 %v1324, 23
      %v1561 = vpop.permute.xlu0 %1560
      %1562 = vrot.lane.b32.xlu0 %v1325, 23
      %v1563 = vpop.permute.xlu0 %1562
      %1564 = vrot.lane.b32.xlu0 %v1326, 23
      %v1565 = vpop.permute.xlu0 %1564
      %vm1566 = vcmask 187392
      %v1567 = vsel %vm1566, %v1559, %v1561
      %v1568 = vsel %vm1566, %v1561, %v1563
      %v1569 = vsel %vm1566, %v1563, %v1565
      %v1574 = vsel %vm278, %v1557, 0
      %1576 = vmatprep.subr.bf16.mxu0 %v1568
      %1577 = vmatpush1.bf16.msra.mxu0 %v1567
      %1578 = vmatprep.subr.bf16.mxu0 0
      %1579 = vmatpush1.bf16.msra.mxu0 0
      %1580 = vmatprep.subr.bf16.mxu0 0
      %1581 = vmatpush1.bf16.msra.mxu0 0
      %1582 = vmatprep.subr.bf16.mxu0 0
      %1583 = vmatpush1.bf16.msra.mxu0 0
      %1584 = vmatprep.subr.bf16.mxu0 0
      %1585 = vmatpush1.bf16.msra.mxu0 0
      %1586 = vmatprep.subr.bf16.mxu0 0
      %1587 = vmatpush1.bf16.msra.mxu0 0
      %1588 = vmatprep.subr.bf16.mxu0 0
      %1589 = vmatpush1.bf16.msra.mxu0 0
      %1590 = vmatprep.subr.bf16.mxu0 0
      %1591 = vmatpush1.bf16.msra.mxu0 0
      %1592 = vmatprep.subr.bf16.mxu0 0
      %1593 = vmatpush1.bf16.msra.mxu0 0
      %1594 = vmatprep.subr.bf16.mxu0 0
      %1595 = vmatpush1.bf16.msra.mxu0 0
      %1596 = vmatprep.subr.bf16.mxu0 0
      %1597 = vmatpush1.bf16.msra.mxu0 0
      %1598 = vmatprep.subr.bf16.mxu0 0
      %1599 = vmatpush1.bf16.msra.mxu0 0
      %1600 = vmatprep.subr.bf16.mxu0 0
      %1601 = vmatpush1.bf16.msra.mxu0 0
      %1602 = vmatprep.subr.bf16.mxu0 0
      %1603 = vmatpush1.bf16.msra.mxu0 0
      %1604 = vmatprep.subr.bf16.mxu0 0
      %1605 = vmatpush1.bf16.msra.mxu0 0
      %1606 = vmatprep.subr.bf16.mxu0 0
      %1607 = vmatpush1.bf16.msra.mxu0 0
      %1608 = vmatprep.mubr.bf16.mxu0 0
      %1609 = vmatmul.mubr.bf16.gmra.mrb[0].mxu0 %v1574
      %v1610 = vpop.f32.mrb[0].mxu0
      %v1611 = vadd.f32 0.0, %v1610
      %v1612 = vpop.f32.mrb[0].mxu0
      %v1613 = vadd.f32 0.0, %v1612
      %v1614 = vpop.f32.mrb[0].mxu0
      %v1615 = vadd.f32 0.0, %v1614
      %v1616 = vpop.f32.mrb[0].mxu0
      %v1617 = vadd.f32 0.0, %v1616
      %1618 = vdwg.mxu0
      %1619 = vmatprep.subr.bf16.mxu0 0
      %1620 = vmatpush1.bf16.msra.mxu0 %v1569
      %1621 = vmatprep.subr.bf16.mxu0 0
      %1622 = vmatpush1.bf16.msra.mxu0 0
      %1623 = vmatprep.subr.bf16.mxu0 0
      %1624 = vmatpush1.bf16.msra.mxu0 0
      %1625 = vmatprep.subr.bf16.mxu0 0
      %1626 = vmatpush1.bf16.msra.mxu0 0
      %1627 = vmatprep.subr.bf16.mxu0 0
      %1628 = vmatpush1.bf16.msra.mxu0 0
      %1629 = vmatprep.subr.bf16.mxu0 0
      %1630 = vmatpush1.bf16.msra.mxu0 0
      %1631 = vmatprep.subr.bf16.mxu0 0
      %1632 = vmatpush1.bf16.msra.mxu0 0
      %1633 = vmatprep.subr.bf16.mxu0 0
      %1634 = vmatpush1.bf16.msra.mxu0 0
      %1635 = vmatprep.subr.bf16.mxu0 0
      %1636 = vmatpush1.bf16.msra.mxu0 0
      %1637 = vmatprep.subr.bf16.mxu0 0
      %1638 = vmatpush1.bf16.msra.mxu0 0
      %1639 = vmatprep.subr.bf16.mxu0 0
      %1640 = vmatpush1.bf16.msra.mxu0 0
      %1641 = vmatprep.subr.bf16.mxu0 0
      %1642 = vmatpush1.bf16.msra.mxu0 0
      %1643 = vmatprep.subr.bf16.mxu0 0
      %1644 = vmatpush1.bf16.msra.mxu0 0
      %1645 = vmatprep.subr.bf16.mxu0 0
      %1646 = vmatpush1.bf16.msra.mxu0 0
      %1647 = vmatprep.subr.bf16.mxu0 0
      %1648 = vmatpush1.bf16.msra.mxu0 0
      %1649 = vmatprep.subr.bf16.mxu0 0
      %1650 = vmatpush1.bf16.msra.mxu0 0
      %1651 = vmatprep.mubr.bf16.mxu0 0
      %1652 = vmatmul.mubr.bf16.gmra.mrb[0].mxu0 %v1574
      %v1653 = vpop.f32.mrb[0].mxu0
      %v1654 = vadd.f32 0.0, %v1653
      %v1655 = vpop.f32.mrb[0].mxu0
      %v1656 = vpop.f32.mrb[0].mxu0
      %v1657 = vadd.f32 0.0, %v1656
      %v1658 = vpop.f32.mrb[0].mxu0
      %1659 = vdwg.mxu0
      %v1660 = vadd.f32 %v1501, %v1611
      %v1661 = vadd.f32 %v1503, %v1613
      %v1662 = vadd.f32 %v1544, %v1654
      %v1663 = vadd.f32 %v1505, %v1615
      %v1664 = vadd.f32 %v1507, %v1617
      %v1665 = vadd.f32 %v1547, %v1657
      %s1666 = scalar_lea.vmem %s2, 24
      %v1667 = vld [vmem:[%s1666] sm:$0xf]
      %v1668 = vld [vmem:[%s1666 + $0x4] sm:$0xf]
      %v1671 = vunpack.c.l.b16 %v1667
      %v1672 = vunpack.c.l.b16 %v1668
      %v1673 = vpack.c.b16 %v1672, %v1671
      %1674 = vrot.lane.b32.xlu0 %v1323, 1
      %v1675 = vpop.permute.xlu0 %1674
      %1676 = vrot.lane.b32.xlu0 %v1324, 1
      %v1677 = vpop.permute.xlu0 %1676
      %1678 = vrot.lane.b32.xlu0 %v1325, 1
      %v1679 = vpop.permute.xlu0 %1678
      %1680 = vrot.lane.b32.xlu0 %v1326, 1
      %v1681 = vpop.permute.xlu0 %1680
      %vm1682 = vcmask 7168
      %v1683 = vsel %vm1682, %v1675, %v1677
      %v1684 = vsel %vm1682, %v1677, %v1679
      %v1685 = vsel %vm1682, %v1679, %v1681
      %v1690 = vsel %vm278, %v1673, 0
      %1692 = vmatprep.subr.bf16.mxu0 %v1684
      %1693 = vmatpush1.bf16.msra.mxu0 %v1683
      %1694 = vmatprep.subr.bf16.mxu0 0
      %1695 = vmatpush1.bf16.msra.mxu0 0
      %1696 = vmatprep.subr.bf16.mxu0 0
      %1697 = vmatpush1.bf16.msra.mxu0 0
      %1698 = vmatprep.subr.bf16.mxu0 0
      %1699 = vmatpush1.bf16.msra.mxu0 0
      %1700 = vmatprep.subr.bf16.mxu0 0
      %1701 = vmatpush1.bf16.msra.mxu0 0
      %1702 = vmatprep.subr.bf16.mxu0 0
      %1703 = vmatpush1.bf16.msra.mxu0 0
      %1704 = vmatprep.subr.bf16.mxu0 0
      %1705 = vmatpush1.bf16.msra.mxu0 0
      %1706 = vmatprep.subr.bf16.mxu0 0
      %1707 = vmatpush1.bf16.msra.mxu0 0
      %1708 = vmatprep.subr.bf16.mxu0 0
      %1709 = vmatpush1.bf16.msra.mxu0 0
      %1710 = vmatprep.subr.bf16.mxu0 0
      %1711 = vmatpush1.bf16.msra.mxu0 0
      %1712 = vmatprep.subr.bf16.mxu0 0
      %1713 = vmatpush1.bf16.msra.mxu0 0
      %1714 = vmatprep.subr.bf16.mxu0 0
      %1715 = vmatpush1.bf16.msra.mxu0 0
      %1716 = vmatprep.subr.bf16.mxu0 0
      %1717 = vmatpush1.bf16.msra.mxu0 0
      %1718 = vmatprep.subr.bf16.mxu0 0
      %1719 = vmatpush1.bf16.msra.mxu0 0
      %1720 = vmatprep.subr.bf16.mxu0 0
      %1721 = vmatpush1.bf16.msra.mxu0 0
      %1722 = vmatprep.subr.bf16.mxu0 0
      %1723 = vmatpush1.bf16.msra.mxu0 0
      %1724 = vmatprep.mubr.bf16.mxu0 0
      %1725 = vmatmul.mubr.bf16.gmra.mrb[0].mxu0 %v1690
      %v1726 = vpop.f32.mrb[0].mxu0
      %v1727 = vadd.f32 0.0, %v1726
      %v1728 = vpop.f32.mrb[0].mxu0
      %v1729 = vadd.f32 0.0, %v1728
      %v1730 = vpop.f32.mrb[0].mxu0
      %v1731 = vadd.f32 0.0, %v1730
      %v1732 = vpop.f32.mrb[0].mxu0
      %v1733 = vadd.f32 0.0, %v1732
      %1734 = vdwg.mxu0
      %1735 = vmatprep.subr.bf16.mxu0 0
      %1736 = vmatpush1.bf16.msra.mxu0 %v1685
      %1737 = vmatprep.subr.bf16.mxu0 0
      %1738 = vmatpush1.bf16.msra.mxu0 0
      %1739 = vmatprep.subr.bf16.mxu0 0
      %1740 = vmatpush1.bf16.msra.mxu0 0
      %1741 = vmatprep.subr.bf16.mxu0 0
      %1742 = vmatpush1.bf16.msra.mxu0 0
      %1743 = vmatprep.subr.bf16.mxu0 0
      %1744 = vmatpush1.bf16.msra.mxu0 0
      %1745 = vmatprep.subr.bf16.mxu0 0
      %1746 = vmatpush1.bf16.msra.mxu0 0
      %1747 = vmatprep.subr.bf16.mxu0 0
      %1748 = vmatpush1.bf16.msra.mxu0 0
      %1749 = vmatprep.subr.bf16.mxu0 0
      %1750 = vmatpush1.bf16.msra.mxu0 0
      %1751 = vmatprep.subr.bf16.mxu0 0
      %1752 = vmatpush1.bf16.msra.mxu0 0
      %1753 = vmatprep.subr.bf16.mxu0 0
      %1754 = vmatpush1.bf16.msra.mxu0 0
      %1755 = vmatprep.subr.bf16.mxu0 0
      %1756 = vmatpush1.bf16.msra.mxu0 0
      %1757 = vmatprep.subr.bf16.mxu0 0
      %1758 = vmatpush1.bf16.msra.mxu0 0
      %1759 = vmatprep.subr.bf16.mxu0 0
      %1760 = vmatpush1.bf16.msra.mxu0 0
      %1761 = vmatprep.subr.bf16.mxu0 0
      %1762 = vmatpush1.bf16.msra.mxu0 0
      %1763 = vmatprep.subr.bf16.mxu0 0
      %1764 = vmatpush1.bf16.msra.mxu0 0
      %1765 = vmatprep.subr.bf16.mxu0 0
      %1766 = vmatpush1.bf16.msra.mxu0 0
      %1767 = vmatprep.mubr.bf16.mxu0 0
      %1768 = vmatmul.mubr.bf16.gmra.mrb[0].mxu0 %v1690
      %v1769 = vpop.f32.mrb[0].mxu0
      %v1770 = vadd.f32 0.0, %v1769
      %v1771 = vpop.f32.mrb[0].mxu0
      %v1772 = vpop.f32.mrb[0].mxu0
      %v1773 = vadd.f32 0.0, %v1772
      %v1774 = vpop.f32.mrb[0].mxu0
      %1775 = vdwg.mxu0
      %v1776 = vadd.f32 %v1660, %v1727
      %v1777 = vadd.f32 %v1661, %v1729
      %v1778 = vadd.f32 %v1662, %v1770
      %v1779 = vadd.f32 %v1663, %v1731
      %v1780 = vadd.f32 %v1664, %v1733
      %v1781 = vadd.f32 %v1665, %v1773
      %s1782 = scalar_lea.vmem %s2, 32
      %v1783 = vld [vmem:[%s1782] sm:$0xf]
      %v1784 = vld [vmem:[%s1782 + $0x4] sm:$0xf]
      %v1787 = vunpack.c.l.b16 %v1783
      %v1788 = vunpack.c.l.b16 %v1784
      %v1789 = vpack.c.b16 %v1788, %v1787
      %v1791 = vsel %vm278, %v1789, 0
      %1793 = vmatprep.subr.bf16.mxu0 %v1325
      %1794 = vmatpush1.bf16.msra.mxu0 %v1324
      %1795 = vmatprep.subr.bf16.mxu0 0
      %1796 = vmatpush1.bf16.msra.mxu0 0
      %1797 = vmatprep.subr.bf16.mxu0 0
      %1798 = vmatpush1.bf16.msra.mxu0 0
      %1799 = vmatprep.subr.bf16.mxu0 0
      %1800 = vmatpush1.bf16.msra.mxu0 0
      %1801 = vmatprep.subr.bf16.mxu0 0
      %1802 = vmatpush1.bf16.msra.mxu0 0
      %1803 = vmatprep.subr.bf16.mxu0 0
      %1804 = vmatpush1.bf16.msra.mxu0 0
      %1805 = vmatprep.subr.bf16.mxu0 0
      %1806 = vmatpush1.bf16.msra.mxu0 0
      %1807 = vmatprep.subr.bf16.mxu0 0
      %1808 = vmatpush1.bf16.msra.mxu0 0
      %1809 = vmatprep.subr.bf16.mxu0 0
      %1810 = vmatpush1.bf16.msra.mxu0 0
      %1811 = vmatprep.subr.bf16.mxu0 0
      %1812 = vmatpush1.bf16.msra.mxu0 0
      %1813 = vmatprep.subr.bf16.mxu0 0
      %1814 = vmatpush1.bf16.msra.mxu0 0
      %1815 = vmatprep.subr.bf16.mxu0 0
      %1816 = vmatpush1.bf16.msra.mxu0 0
      %1817 = vmatprep.subr.bf16.mxu0 0
      %1818 = vmatpush1.bf16.msra.mxu0 0
      %1819 = vmatprep.subr.bf16.mxu0 0
      %1820 = vmatpush1.bf16.msra.mxu0 0
      %1821 = vmatprep.subr.bf16.mxu0 0
      %1822 = vmatpush1.bf16.msra.mxu0 0
      %1823 = vmatprep.subr.bf16.mxu0 0
      %1824 = vmatpush1.bf16.msra.mxu0 0
      %1825 = vmatprep.mubr.bf16.mxu0 0
      %1826 = vmatmul.mubr.bf16.gmra.mrb[0].mxu0 %v1791
      %v1827 = vpop.f32.mrb[0].mxu0
      %v1828 = vadd.f32 0.0, %v1827
      %v1829 = vpop.f32.mrb[0].mxu0
      %v1830 = vadd.f32 0.0, %v1829
      %v1831 = vpop.f32.mrb[0].mxu0
      %v1832 = vadd.f32 0.0, %v1831
      %v1833 = vpop.f32.mrb[0].mxu0
      %v1834 = vadd.f32 0.0, %v1833
      %1835 = vdwg.mxu0
      %1836 = vmatprep.subr.bf16.mxu0 0
      %1837 = vmatpush1.bf16.msra.mxu0 %v1326
      %1838 = vmatprep.subr.bf16.mxu0 0
      %1839 = vmatpush1.bf16.msra.mxu0 0
      %1840 = vmatprep.subr.bf16.mxu0 0
      %1841 = vmatpush1.bf16.msra.mxu0 0
      %1842 = vmatprep.subr.bf16.mxu0 0
      %1843 = vmatpush1.bf16.msra.mxu0 0
      %1844 = vmatprep.subr.bf16.mxu0 0
      %1845 = vmatpush1.bf16.msra.mxu0 0
      %1846 = vmatprep.subr.bf16.mxu0 0
      %1847 = vmatpush1.bf16.msra.mxu0 0
      %1848 = vmatprep.subr.bf16.mxu0 0
      %1849 = vmatpush1.bf16.msra.mxu0 0
      %1850 = vmatprep.subr.bf16.mxu0 0
      %1851 = vmatpush1.bf16.msra.mxu0 0
      %1852 = vmatprep.subr.bf16.mxu0 0
      %1853 = vmatpush1.bf16.msra.mxu0 0
      %1854 = vmatprep.subr.bf16.mxu0 0
      %1855 = vmatpush1.bf16.msra.mxu0 0
      %1856 = vmatprep.subr.bf16.mxu0 0
      %1857 = vmatpush1.bf16.msra.mxu0 0
      %1858 = vmatprep.subr.bf16.mxu0 0
      %1859 = vmatpush1.bf16.msra.mxu0 0
      %1860 = vmatprep.subr.bf16.mxu0 0
      %1861 = vmatpush1.bf16.msra.mxu0 0
      %1862 = vmatprep.subr.bf16.mxu0 0
      %1863 = vmatpush1.bf16.msra.mxu0 0
      %1864 = vmatprep.subr.bf16.mxu0 0
      %1865 = vmatpush1.bf16.msra.mxu0 0
      %1866 = vmatprep.subr.bf16.mxu0 0
      %1867 = vmatpush1.bf16.msra.mxu0 0
      %1868 = vmatprep.mubr.bf16.mxu0 0
      %1869 = vmatmul.mubr.bf16.gmra.mrb[0].mxu0 %v1791
      %v1870 = vpop.f32.mrb[0].mxu0
      %v1871 = vadd.f32 0.0, %v1870
      %v1872 = vpop.f32.mrb[0].mxu0
      %v1873 = vpop.f32.mrb[0].mxu0
      %v1874 = vadd.f32 0.0, %v1873
      %v1875 = vpop.f32.mrb[0].mxu0
      %1876 = vdwg.mxu0
      %v1877 = vadd.f32 %v1776, %v1828
      %v1878 = vadd.f32 %v1777, %v1830
      %v1879 = vadd.f32 %v1778, %v1871
      %v1880 = vadd.f32 %v1779, %v1832
      %v1881 = vadd.f32 %v1780, %v1834
      %v1882 = vadd.f32 %v1781, %v1874
      %v1883 = vld [vmem:[#allocation3 + $0x8] sm:$0xff]
      %v1884 = vld [vmem:[#allocation3 + $0x10] sm:$0xff]
      %v1885 = vld [vmem:[#allocation3 + $0x18] sm:$0xff]
      %v1886 = vld [vmem:[#allocation3 + $0x20] sm:$0xff]
      %s1887 = scalar_lea.vmem %s2, 40
      %v1888 = vld [vmem:[%s1887] sm:$0xf]
      %v1889 = vld [vmem:[%s1887 + $0x4] sm:$0xf]
      %v1892 = vunpack.c.l.b16 %v1888
      %v1893 = vunpack.c.l.b16 %v1889
      %v1894 = vpack.c.b16 %v1893, %v1892
      %1899 = vrot.lane.b32.xlu0 %v1883, 127
      %v1900 = vpop.permute.xlu0 %1899
      %1901 = vrot.lane.b32.xlu0 %v1884, 127
      %v1902 = vpop.permute.xlu0 %1901
      %1903 = vrot.lane.b32.xlu0 %v1885, 127
      %v1904 = vpop.permute.xlu0 %1903
      %1905 = vrot.lane.b32.xlu0 %v1886, 127
      %v1906 = vpop.permute.xlu0 %1905
      %v1907 = vsel %vm271, %v1900, %v1902
      %v1908 = vsel %vm271, %v1902, %v1904
      %v1909 = vsel %vm271, %v1904, %v1906
      %v1914 = vsel %vm278, %v1894, 0
      %1916 = vmatprep.subr.bf16.mxu0 %v1908
      %1917 = vmatpush1.bf16.msra.mxu0 %v1907
      %1918 = vmatprep.subr.bf16.mxu0 0
      %1919 = vmatpush1.bf16.msra.mxu0 0
      %1920 = vmatprep.subr.bf16.mxu0 0
      %1921 = vmatpush1.bf16.msra.mxu0 0
      %1922 = vmatprep.subr.bf16.mxu0 0
      %1923 = vmatpush1.bf16.msra.mxu0 0
      %1924 = vmatprep.subr.bf16.mxu0 0
      %1925 = vmatpush1.bf16.msra.mxu0 0
      %1926 = vmatprep.subr.bf16.mxu0 0
      %1927 = vmatpush1.bf16.msra.mxu0 0
      %1928 = vmatprep.subr.bf16.mxu0 0
      %1929 = vmatpush1.bf16.msra.mxu0 0
      %1930 = vmatprep.subr.bf16.mxu0 0
      %1931 = vmatpush1.bf16.msra.mxu0 0
      %1932 = vmatprep.subr.bf16.mxu0 0
      %1933 = vmatpush1.bf16.msra.mxu0 0
      %1934 = vmatprep.subr.bf16.mxu0 0
      %1935 = vmatpush1.bf16.msra.mxu0 0
      %1936 = vmatprep.subr.bf16.mxu0 0
      %1937 = vmatpush1.bf16.msra.mxu0 0
      %1938 = vmatprep.subr.bf16.mxu0 0
      %1939 = vmatpush1.bf16.msra.mxu0 0
      %1940 = vmatprep.subr.bf16.mxu0 0
      %1941 = vmatpush1.bf16.msra.mxu0 0
      %1942 = vmatprep.subr.bf16.mxu0 0
      %1943 = vmatpush1.bf16.msra.mxu0 0
      %1944 = vmatprep.subr.bf16.mxu0 0
      %1945 = vmatpush1.bf16.msra.mxu0 0
      %1946 = vmatprep.subr.bf16.mxu0 0
      %1947 = vmatpush1.bf16.msra.mxu0 0
      %1948 = vmatprep.mubr.bf16.mxu0 0
      %1949 = vmatmul.mubr.bf16.gmra.mrb[0].mxu0 %v1914
      %v1950 = vpop.f32.mrb[0].mxu0
      %v1951 = vadd.f32 0.0, %v1950
      %v1952 = vpop.f32.mrb[0].mxu0
      %v1953 = vadd.f32 0.0, %v1952
      %v1954 = vpop.f32.mrb[0].mxu0
      %v1955 = vadd.f32 0.0, %v1954
      %v1956 = vpop.f32.mrb[0].mxu0
      %v1957 = vadd.f32 0.0, %v1956
      %1958 = vdwg.mxu0
      %1959 = vmatprep.subr.bf16.mxu0 0
      %1960 = vmatpush1.bf16.msra.mxu0 %v1909
      %1961 = vmatprep.subr.bf16.mxu0 0
      %1962 = vmatpush1.bf16.msra.mxu0 0
      %1963 = vmatprep.subr.bf16.mxu0 0
      %1964 = vmatpush1.bf16.msra.mxu0 0
      %1965 = vmatprep.subr.bf16.mxu0 0
      %1966 = vmatpush1.bf16.msra.mxu0 0
      %1967 = vmatprep.subr.bf16.mxu0 0
      %1968 = vmatpush1.bf16.msra.mxu0 0
      %1969 = vmatprep.subr.bf16.mxu0 0
      %1970 = vmatpush1.bf16.msra.mxu0 0
      %1971 = vmatprep.subr.bf16.mxu0 0
      %1972 = vmatpush1.bf16.msra.mxu0 0
      %1973 = vmatprep.subr.bf16.mxu0 0
      %1974 = vmatpush1.bf16.msra.mxu0 0
      %1975 = vmatprep.subr.bf16.mxu0 0
      %1976 = vmatpush1.bf16.msra.mxu0 0
      %1977 = vmatprep.subr.bf16.mxu0 0
      %1978 = vmatpush1.bf16.msra.mxu0 0
      %1979 = vmatprep.subr.bf16.mxu0 0
      %1980 = vmatpush1.bf16.msra.mxu0 0
      %1981 = vmatprep.subr.bf16.mxu0 0
      %1982 = vmatpush1.bf16.msra.mxu0 0
      %1983 = vmatprep.subr.bf16.mxu0 0
      %1984 = vmatpush1.bf16.msra.mxu0 0
      %1985 = vmatprep.subr.bf16.mxu0 0
      %1986 = vmatpush1.bf16.msra.mxu0 0
      %1987 = vmatprep.subr.bf16.mxu0 0
      %1988 = vmatpush1.bf16.msra.mxu0 0
      %1989 = vmatprep.subr.bf16.mxu0 0
      %1990 = vmatpush1.bf16.msra.mxu0 0
      %1991 = vmatprep.mubr.bf16.mxu0 0
      %1992 = vmatmul.mubr.bf16.gmra.mrb[0].mxu0 %v1914
      %v1993 = vpop.f32.mrb[0].mxu0
      %v1994 = vadd.f32 0.0, %v1993
      %v1995 = vpop.f32.mrb[0].mxu0
      %v1996 = vpop.f32.mrb[0].mxu0
      %v1997 = vadd.f32 0.0, %v1996
      %v1998 = vpop.f32.mrb[0].mxu0
      %1999 = vdwg.mxu0
      %v2000 = vadd.f32 %v1877, %v1951
      %v2001 = vadd.f32 %v1878, %v1953
      %v2002 = vadd.f32 %v1879, %v1994
      %v2003 = vadd.f32 %v1880, %v1955
      %v2004 = vadd.f32 %v1881, %v1957
      %v2005 = vadd.f32 %v1882, %v1997
      %s2006 = scalar_lea.vmem %s2, 48
      %v2007 = vld [vmem:[%s2006] sm:$0xf]
      %v2008 = vld [vmem:[%s2006 + $0x4] sm:$0xf]
      %v2011 = vunpack.c.l.b16 %v2007
      %v2012 = vunpack.c.l.b16 %v2008
      %v2013 = vpack.c.b16 %v2012, %v2011
      %2014 = vrot.lane.b32.xlu0 %v1883, 105
      %v2015 = vpop.permute.xlu0 %2014
      %2016 = vrot.lane.b32.xlu0 %v1884, 105
      %v2017 = vpop.permute.xlu0 %2016
      %2018 = vrot.lane.b32.xlu0 %v1885, 105
      %v2019 = vpop.permute.xlu0 %2018
      %2020 = vrot.lane.b32.xlu0 %v1886, 105
      %v2021 = vpop.permute.xlu0 %2020
      %vm2022 = vcmask 859136
      %v2023 = vsel %vm2022, %v2015, %v2017
      %v2024 = vsel %vm2022, %v2017, %v2019
      %v2025 = vsel %vm2022, %v2019, %v2021
      %v2030 = vsel %vm278, %v2013, 0
      %2032 = vmatprep.subr.bf16.mxu0 %v2024
      %2033 = vmatpush1.bf16.msra.mxu0 %v2023
      %2034 = vmatprep.subr.bf16.mxu0 0
      %2035 = vmatpush1.bf16.msra.mxu0 0
      %2036 = vmatprep.subr.bf16.mxu0 0
      %2037 = vmatpush1.bf16.msra.mxu0 0
      %2038 = vmatprep.subr.bf16.mxu0 0
      %2039 = vmatpush1.bf16.msra.mxu0 0
      %2040 = vmatprep.subr.bf16.mxu0 0
      %2041 = vmatpush1.bf16.msra.mxu0 0
      %2042 = vmatprep.subr.bf16.mxu0 0
      %2043 = vmatpush1.bf16.msra.mxu0 0
      %2044 = vmatprep.subr.bf16.mxu0 0
      %2045 = vmatpush1.bf16.msra.mxu0 0
      %2046 = vmatprep.subr.bf16.mxu0 0
      %2047 = vmatpush1.bf16.msra.mxu0 0
      %2048 = vmatprep.subr.bf16.mxu0 0
      %2049 = vmatpush1.bf16.msra.mxu0 0
      %2050 = vmatprep.subr.bf16.mxu0 0
      %2051 = vmatpush1.bf16.msra.mxu0 0
      %2052 = vmatprep.subr.bf16.mxu0 0
      %2053 = vmatpush1.bf16.msra.mxu0 0
      %2054 = vmatprep.subr.bf16.mxu0 0
      %2055 = vmatpush1.bf16.msra.mxu0 0
      %2056 = vmatprep.subr.bf16.mxu0 0
      %2057 = vmatpush1.bf16.msra.mxu0 0
      %2058 = vmatprep.subr.bf16.mxu0 0
      %2059 = vmatpush1.bf16.msra.mxu0 0
      %2060 = vmatprep.subr.bf16.mxu0 0
      %2061 = vmatpush1.bf16.msra.mxu0 0
      %2062 = vmatprep.subr.bf16.mxu0 0
      %2063 = vmatpush1.bf16.msra.mxu0 0
      %2064 = vmatprep.mubr.bf16.mxu0 0
      %2065 = vmatmul.mubr.bf16.gmra.mrb[0].mxu0 %v2030
      %v2066 = vpop.f32.mrb[0].mxu0
      %v2067 = vadd.f32 0.0, %v2066
      %v2068 = vpop.f32.mrb[0].mxu0
      %v2069 = vadd.f32 0.0, %v2068
      %v2070 = vpop.f32.mrb[0].mxu0
      %v2071 = vadd.f32 0.0, %v2070
      %v2072 = vpop.f32.mrb[0].mxu0
      %v2073 = vadd.f32 0.0, %v2072
      %2074 = vdwg.mxu0
      %2075 = vmatprep.subr.bf16.mxu0 0
      %2076 = vmatpush1.bf16.msra.mxu0 %v2025
      %2077 = vmatprep.subr.bf16.mxu0 0
      %2078 = vmatpush1.bf16.msra.mxu0 0
      %2079 = vmatprep.subr.bf16.mxu0 0
      %2080 = vmatpush1.bf16.msra.mxu0 0
      %2081 = vmatprep.subr.bf16.mxu0 0
      %2082 = vmatpush1.bf16.msra.mxu0 0
      %2083 = vmatprep.subr.bf16.mxu0 0
      %2084 = vmatpush1.bf16.msra.mxu0 0
      %2085 = vmatprep.subr.bf16.mxu0 0
      %2086 = vmatpush1.bf16.msra.mxu0 0
      %2087 = vmatprep.subr.bf16.mxu0 0
      %2088 = vmatpush1.bf16.msra.mxu0 0
      %2089 = vmatprep.subr.bf16.mxu0 0
      %2090 = vmatpush1.bf16.msra.mxu0 0
      %2091 = vmatprep.subr.bf16.mxu0 0
      %2092 = vmatpush1.bf16.msra.mxu0 0
      %2093 = vmatprep.subr.bf16.mxu0 0
      %2094 = vmatpush1.bf16.msra.mxu0 0
      %2095 = vmatprep.subr.bf16.mxu0 0
      %2096 = vmatpush1.bf16.msra.mxu0 0
      %2097 = vmatprep.subr.bf16.mxu0 0
      %2098 = vmatpush1.bf16.msra.mxu0 0
      %2099 = vmatprep.subr.bf16.mxu0 0
      %2100 = vmatpush1.bf16.msra.mxu0 0
      %2101 = vmatprep.subr.bf16.mxu0 0
      %2102 = vmatpush1.bf16.msra.mxu0 0
      %2103 = vmatprep.subr.bf16.mxu0 0
      %2104 = vmatpush1.bf16.msra.mxu0 0
      %2105 = vmatprep.subr.bf16.mxu0 0
      %2106 = vmatpush1.bf16.msra.mxu0 0
      %2107 = vmatprep.mubr.bf16.mxu0 0
      %2108 = vmatmul.mubr.bf16.gmra.mrb[0].mxu0 %v2030
      %v2109 = vpop.f32.mrb[0].mxu0
      %v2110 = vadd.f32 0.0, %v2109
      %v2111 = vpop.f32.mrb[0].mxu0
      %v2112 = vpop.f32.mrb[0].mxu0
      %v2113 = vadd.f32 0.0, %v2112
      %v2114 = vpop.f32.mrb[0].mxu0
      %2115 = vdwg.mxu0
      %v2116 = vadd.f32 %v2000, %v2067
      %v2117 = vadd.f32 %v2001, %v2069
      %v2118 = vadd.f32 %v2002, %v2110
      %v2119 = vadd.f32 %v2003, %v2071
      %v2120 = vadd.f32 %v2004, %v2073
      %v2121 = vadd.f32 %v2005, %v2113
      %s2122 = scalar_lea.vmem %s2, 56
      %v2123 = vld [vmem:[%s2122] sm:$0xf]
      %v2124 = vld [vmem:[%s2122 + $0x4] sm:$0xf]
      %v2127 = vunpack.c.l.b16 %v2123
      %v2128 = vunpack.c.l.b16 %v2124
      %v2129 = vpack.c.b16 %v2128, %v2127
      %2130 = vrot.lane.b32.xlu0 %v1883, 104
      %v2131 = vpop.permute.xlu0 %2130
      %2132 = vrot.lane.b32.xlu0 %v1884, 104
      %v2133 = vpop.permute.xlu0 %2132
      %2134 = vrot.lane.b32.xlu0 %v1885, 104
      %v2135 = vpop.permute.xlu0 %2134
      %2136 = vrot.lane.b32.xlu0 %v1886, 104
      %v2137 = vpop.permute.xlu0 %2136
      %v2138 = vsel %vm590, %v2131, %v2133
      %v2139 = vsel %vm590, %v2133, %v2135
      %v2140 = vsel %vm590, %v2135, %v2137
      %v2145 = vsel %vm278, %v2129, 0
      %2147 = vmatprep.subr.bf16.mxu0 %v2139
      %2148 = vmatpush1.bf16.msra.mxu0 %v2138
      %2149 = vmatprep.subr.bf16.mxu0 0
      %2150 = vmatpush1.bf16.msra.mxu0 0
      %2151 = vmatprep.subr.bf16.mxu0 0
      %2152 = vmatpush1.bf16.msra.mxu0 0
      %2153 = vmatprep.subr.bf16.mxu0 0
      %2154 = vmatpush1.bf16.msra.mxu0 0
      %2155 = vmatprep.subr.bf16.mxu0 0
      %2156 = vmatpush1.bf16.msra.mxu0 0
      %2157 = vmatprep.subr.bf16.mxu0 0
      %2158 = vmatpush1.bf16.msra.mxu0 0
      %2159 = vmatprep.subr.bf16.mxu0 0
      %2160 = vmatpush1.bf16.msra.mxu0 0
      %2161 = vmatprep.subr.bf16.mxu0 0
      %2162 = vmatpush1.bf16.msra.mxu0 0
      %2163 = vmatprep.subr.bf16.mxu0 0
      %2164 = vmatpush1.bf16.msra.mxu0 0
      %2165 = vmatprep.subr.bf16.mxu0 0
      %2166 = vmatpush1.bf16.msra.mxu0 0
      %2167 = vmatprep.subr.bf16.mxu0 0
      %2168 = vmatpush1.bf16.msra.mxu0 0
      %2169 = vmatprep.subr.bf16.mxu0 0
      %2170 = vmatpush1.bf16.msra.mxu0 0
      %2171 = vmatprep.subr.bf16.mxu0 0
      %2172 = vmatpush1.bf16.msra.mxu0 0
      %2173 = vmatprep.subr.bf16.mxu0 0
      %2174 = vmatpush1.bf16.msra.mxu0 0
      %2175 = vmatprep.subr.bf16.mxu0 0
      %2176 = vmatpush1.bf16.msra.mxu0 0
      %2177 = vmatprep.subr.bf16.mxu0 0
      %2178 = vmatpush1.bf16.msra.mxu0 0
      %2179 = vmatprep.mubr.bf16.mxu0 0
      %2180 = vmatmul.mubr.bf16.gmra.mrb[0].mxu0 %v2145
      %v2181 = vpop.f32.mrb[0].mxu0
      %v2182 = vadd.f32 0.0, %v2181
      %v2183 = vpop.f32.mrb[0].mxu0
      %v2184 = vadd.f32 0.0, %v2183
      %v2185 = vpop.f32.mrb[0].mxu0
      %v2186 = vadd.f32 0.0, %v2185
      %v2187 = vpop.f32.mrb[0].mxu0
      %v2188 = vadd.f32 0.0, %v2187
      %2189 = vdwg.mxu0
      %2190 = vmatprep.subr.bf16.mxu0 0
      %2191 = vmatpush1.bf16.msra.mxu0 %v2140
      %2192 = vmatprep.subr.bf16.mxu0 0
      %2193 = vmatpush1.bf16.msra.mxu0 0
      %2194 = vmatprep.subr.bf16.mxu0 0
      %2195 = vmatpush1.bf16.msra.mxu0 0
      %2196 = vmatprep.subr.bf16.mxu0 0
      %2197 = vmatpush1.bf16.msra.mxu0 0
      %2198 = vmatprep.subr.bf16.mxu0 0
      %2199 = vmatpush1.bf16.msra.mxu0 0
      %2200 = vmatprep.subr.bf16.mxu0 0
      %2201 = vmatpush1.bf16.msra.mxu0 0
      %2202 = vmatprep.subr.bf16.mxu0 0
      %2203 = vmatpush1.bf16.msra.mxu0 0
      %2204 = vmatprep.subr.bf16.mxu0 0
      %2205 = vmatpush1.bf16.msra.mxu0 0
      %2206 = vmatprep.subr.bf16.mxu0 0
      %2207 = vmatpush1.bf16.msra.mxu0 0
      %2208 = vmatprep.subr.bf16.mxu0 0
      %2209 = vmatpush1.bf16.msra.mxu0 0
      %2210 = vmatprep.subr.bf16.mxu0 0
      %2211 = vmatpush1.bf16.msra.mxu0 0
      %2212 = vmatprep.subr.bf16.mxu0 0
      %2213 = vmatpush1.bf16.msra.mxu0 0
      %2214 = vmatprep.subr.bf16.mxu0 0
      %2215 = vmatpush1.bf16.msra.mxu0 0
      %2216 = vmatprep.subr.bf16.mxu0 0
      %2217 = vmatpush1.bf16.msra.mxu0 0
      %2218 = vmatprep.subr.bf16.mxu0 0
      %2219 = vmatpush1.bf16.msra.mxu0 0
      %2220 = vmatprep.subr.bf16.mxu0 0
      %2221 = vmatpush1.bf16.msra.mxu0 0
      %2222 = vmatprep.mubr.bf16.mxu0 0
      %2223 = vmatmul.mubr.bf16.gmra.mrb[0].mxu0 %v2145
      %v2224 = vpop.f32.mrb[0].mxu0
      %v2225 = vadd.f32 0.0, %v2224
      %v2226 = vpop.f32.mrb[0].mxu0
      %v2227 = vpop.f32.mrb[0].mxu0
      %v2228 = vadd.f32 0.0, %v2227
      %v2229 = vpop.f32.mrb[0].mxu0
      %2230 = vdwg.mxu0
      %v2231 = vadd.f32 %v2116, %v2182
      %v2232 = vadd.f32 %v2117, %v2184
      %v2233 = vadd.f32 %v2118, %v2225
      %v2234 = vadd.f32 %v2119, %v2186
      %v2235 = vadd.f32 %v2120, %v2188
      %v2236 = vadd.f32 %v2121, %v2228
      %s2237 = scalar_lea.vmem %s2, 64
      %v2238 = vld [vmem:[%s2237] sm:$0xf]
      %v2239 = vld [vmem:[%s2237 + $0x4] sm:$0xf]
      %v2242 = vunpack.c.l.b16 %v2238
      %v2243 = vunpack.c.l.b16 %v2239
      %v2244 = vpack.c.b16 %v2243, %v2242
      %2245 = vrot.lane.b32.xlu0 %v1883, 103
      %v2246 = vpop.permute.xlu0 %2245
      %2247 = vrot.lane.b32.xlu0 %v1884, 103
      %v2248 = vpop.permute.xlu0 %2247
      %2249 = vrot.lane.b32.xlu0 %v1885, 103
      %v2250 = vpop.permute.xlu0 %2249
      %2251 = vrot.lane.b32.xlu0 %v1886, 103
      %v2252 = vpop.permute.xlu0 %2251
      %v2253 = vsel %vm706, %v2246, %v2248
      %v2254 = vsel %vm706, %v2248, %v2250
      %v2255 = vsel %vm706, %v2250, %v2252
      %v2260 = vsel %vm278, %v2244, 0
      %2262 = vmatprep.subr.bf16.mxu0 %v2254
      %2263 = vmatpush1.bf16.msra.mxu0 %v2253
      %2264 = vmatprep.subr.bf16.mxu0 0
      %2265 = vmatpush1.bf16.msra.mxu0 0
      %2266 = vmatprep.subr.bf16.mxu0 0
      %2267 = vmatpush1.bf16.msra.mxu0 0
      %2268 = vmatprep.subr.bf16.mxu0 0
      %2269 = vmatpush1.bf16.msra.mxu0 0
      %2270 = vmatprep.subr.bf16.mxu0 0
      %2271 = vmatpush1.bf16.msra.mxu0 0
      %2272 = vmatprep.subr.bf16.mxu0 0
      %2273 = vmatpush1.bf16.msra.mxu0 0
      %2274 = vmatprep.subr.bf16.mxu0 0
      %2275 = vmatpush1.bf16.msra.mxu0 0
      %2276 = vmatprep.subr.bf16.mxu0 0
      %2277 = vmatpush1.bf16.msra.mxu0 0
      %2278 = vmatprep.subr.bf16.mxu0 0
      %2279 = vmatpush1.bf16.msra.mxu0 0
      %2280 = vmatprep.subr.bf16.mxu0 0
      %2281 = vmatpush1.bf16.msra.mxu0 0
      %2282 = vmatprep.subr.bf16.mxu0 0
      %2283 = vmatpush1.bf16.msra.mxu0 0
      %2284 = vmatprep.subr.bf16.mxu0 0
      %2285 = vmatpush1.bf16.msra.mxu0 0
      %2286 = vmatprep.subr.bf16.mxu0 0
      %2287 = vmatpush1.bf16.msra.mxu0 0
      %2288 = vmatprep.subr.bf16.mxu0 0
      %2289 = vmatpush1.bf16.msra.mxu0 0
      %2290 = vmatprep.subr.bf16.mxu0 0
      %2291 = vmatpush1.bf16.msra.mxu0 0
      %2292 = vmatprep.subr.bf16.mxu0 0
      %2293 = vmatpush1.bf16.msra.mxu0 0
      %2294 = vmatprep.mubr.bf16.mxu0 0
      %2295 = vmatmul.mubr.bf16.gmra.mrb[0].mxu0 %v2260
      %v2296 = vpop.f32.mrb[0].mxu0
      %v2297 = vadd.f32 0.0, %v2296
      %v2298 = vpop.f32.mrb[0].mxu0
      %v2299 = vadd.f32 0.0, %v2298
      %v2300 = vpop.f32.mrb[0].mxu0
      %v2301 = vadd.f32 0.0, %v2300
      %v2302 = vpop.f32.mrb[0].mxu0
      %v2303 = vadd.f32 0.0, %v2302
      %2304 = vdwg.mxu0
      %2305 = vmatprep.subr.bf16.mxu0 0
      %2306 = vmatpush1.bf16.msra.mxu0 %v2255
      %2307 = vmatprep.subr.bf16.mxu0 0
      %2308 = vmatpush1.bf16.msra.mxu0 0
      %2309 = vmatprep.subr.bf16.mxu0 0
      %2310 = vmatpush1.bf16.msra.mxu0 0
      %2311 = vmatprep.subr.bf16.mxu0 0
      %2312 = vmatpush1.bf16.msra.mxu0 0
      %2313 = vmatprep.subr.bf16.mxu0 0
      %2314 = vmatpush1.bf16.msra.mxu0 0
      %2315 = vmatprep.subr.bf16.mxu0 0
      %2316 = vmatpush1.bf16.msra.mxu0 0
      %2317 = vmatprep.subr.bf16.mxu0 0
      %2318 = vmatpush1.bf16.msra.mxu0 0
      %2319 = vmatprep.subr.bf16.mxu0 0
      %2320 = vmatpush1.bf16.msra.mxu0 0
      %2321 = vmatprep.subr.bf16.mxu0 0
      %2322 = vmatpush1.bf16.msra.mxu0 0
      %2323 = vmatprep.subr.bf16.mxu0 0
      %2324 = vmatpush1.bf16.msra.mxu0 0
      %2325 = vmatprep.subr.bf16.mxu0 0
      %2326 = vmatpush1.bf16.msra.mxu0 0
      %2327 = vmatprep.subr.bf16.mxu0 0
      %2328 = vmatpush1.bf16.msra.mxu0 0
      %2329 = vmatprep.subr.bf16.mxu0 0
      %2330 = vmatpush1.bf16.msra.mxu0 0
      %2331 = vmatprep.subr.bf16.mxu0 0
      %2332 = vmatpush1.bf16.msra.mxu0 0
      %2333 = vmatprep.subr.bf16.mxu0 0
      %2334 = vmatpush1.bf16.msra.mxu0 0
      %2335 = vmatprep.subr.bf16.mxu0 0
      %2336 = vmatpush1.bf16.msra.mxu0 0
      %2337 = vmatprep.mubr.bf16.mxu0 0
      %2338 = vmatmul.mubr.bf16.gmra.mrb[0].mxu0 %v2260
      %v2339 = vpop.f32.mrb[0].mxu0
      %v2340 = vadd.f32 0.0, %v2339
      %v2341 = vpop.f32.mrb[0].mxu0
      %v2342 = vpop.f32.mrb[0].mxu0
      %v2343 = vadd.f32 0.0, %v2342
      %v2344 = vpop.f32.mrb[0].mxu0
      %2345 = vdwg.mxu0
      %v2346 = vadd.f32 %v2231, %v2297
      %v2347 = vadd.f32 %v2232, %v2299
      %v2348 = vadd.f32 %v2233, %v2340
      %v2349 = vadd.f32 %v2234, %v2301
      %v2350 = vadd.f32 %v2235, %v2303
      %v2351 = vadd.f32 %v2236, %v2343
      %s2352 = scalar_lea.vmem %s3, 16
      %v2353 = vld [vmem:[%s2352] sm:$0xff]
      %v2354 = vld [vmem:[%s2352 + $0x8] sm:$0xff]
      %2356 = vset.pattern.permute.xlu0 0
      %2357 = vperm.xlu0 %2356, %v2353
      %v2358 = vpop.permute.xlu0 %2357
      %2361 = vset.pattern.permute.xlu0 0
      %2362 = vperm.xlu0 %2361, %v2354
      %v2363 = vpop.permute.xlu0 %2362
      %v2365 = vadd.f32 %v2346, %v2358
      %v2366 = vadd.f32 %v2347, %v2358
      %v2367 = vadd.f32 %v2348, %v2358
      %v2368 = vadd.f32 %v2349, %v2363
      %v2369 = vadd.f32 %v2350, %v2363
      %v2370 = vadd.f32 %v2351, %v2363
      %v2371 = vld [vmem:[%s219] sm:$0xff]
      %v2372 = vld [vmem:[%s219 + $0x8] sm:$0xff]
      %v2373 = vld [vmem:[%s219 + $0x10] sm:$0xff]
      %v2374 = vld [vmem:[%s219 + $0x18] sm:$0xff]
      %v2375 = vld [vmem:[%s219 + $0x20] sm:$0xff]
      %v2376 = vld [vmem:[%s219 + $0x28] sm:$0xff]
      %v2377 = vld [vmem:[%s219 + $0x30] sm:$0xff]
      %v2378 = vld [vmem:[%s219 + $0x38] sm:$0xff]
      %2387 = vrot.lane.b32.xlu0 %v2371, 103
      %v2388 = vpop.permute.xlu0 %2387
      %2389 = vrot.lane.b32.xlu0 %v2372, 103
      %v2390 = vpop.permute.xlu0 %2389
      %2391 = vrot.lane.b32.xlu0 %v2373, 103
      %v2392 = vpop.permute.xlu0 %2391
      %2393 = vrot.lane.b32.xlu0 %v2374, 103
      %v2394 = vpop.permute.xlu0 %2393
      %2395 = vrot.lane.b32.xlu0 %v2375, 103
      %v2396 = vpop.permute.xlu0 %2395
      %2397 = vrot.lane.b32.xlu0 %v2376, 103
      %v2398 = vpop.permute.xlu0 %2397
      %2399 = vrot.lane.b32.xlu0 %v2377, 103
      %v2400 = vpop.permute.xlu0 %2399
      %2401 = vrot.lane.b32.xlu0 %v2378, 103
      %v2402 = vpop.permute.xlu0 %2401
      %vm2403 = vcmask 842752
      %v2404 = vsel %vm2403, %v2388, %v2390
      %v2405 = vsel %vm2403, %v2390, %v2392
      %v2406 = vsel %vm2403, %v2392, %v2394
      %v2407 = vsel %vm2403, %v2396, %v2398
      %v2408 = vsel %vm2403, %v2398, %v2400
      %v2409 = vsel %vm2403, %v2400, %v2402
      %v2416 = vadd.f32 %v2365, %v2404
      %v2417 = vadd.f32 %v2366, %v2405
      %v2418 = vadd.f32 %v2367, %v2406
      %v2419 = vadd.f32 %v2368, %v2407
      %v2420 = vadd.f32 %v2369, %v2408
      %v2421 = vadd.f32 %v2370, %v2409
      %2422 = vst [vmem:[%s224] sm:$0xff] %v2416
      %2423 = vst [vmem:[%s224 + $0x8] sm:$0xff] %v2417
      %2424 = vst [vmem:[%s224 + $0x10] sm:$0xff] %v2418
      %2425 = vst [vmem:[%s224 + $0x18] sm:$0xff] %v2419
      %2426 = vst [vmem:[%s224 + $0x20] sm:$0xff] %v2420
      %2427 = vst [vmem:[%s224 + $0x28] sm:$0xff] %v2421
      %p2428 = scmp.lt.s32.totalorder %s16, 1
      %s2429 = scalar_select %p2428, %s16, 1
      %s2430 = smul.addr %s2429, 6
      %s2431 = smul.addr %s2430, 8
      %s2432 = scalar_lea.vmem %s5, %s2431
      // Predicated region
      $region41: #{basic_block_forward.1} parent=39 // pred_check
        %p2433 = pneg %p144
      $region42: #{basic_block_forward.1} parent=39 // pred_check_branch
        %2435 = sbr.rel (%p2433) target = $region44
      $region43: #{basic_block_forward.1} parent=39 // pred_region
        _
      $region44: #{basic_block_forward.1} parent=39 // pred_fallthru
        _
    $region40: #{basic_block_forward.1} parent=5 // pred_fallthru
      _
    %p2436 = scmp.le.s32.totalorder 2, %s11
    // Predicated region
    $region45: #{basic_block_forward.1} parent=5 // pred_check
      %p2437 = pneg %p2436
    $region46: #{basic_block_forward.1} parent=5 // pred_check_branch
      %2439 = sbr.rel (%p2437) target = $region48
    $region47: #{basic_block_forward.1} parent=5 // pred_region
      %s2440 = ssub.s32 %s11, 2
      // Predicated region
      $region49: #{basic_block_forward.1} parent=47 // pred_check
        %p2441 = pneg %p150
      $region50: #{basic_block_forward.1} parent=47 // pred_check_branch
        %2443 = sbr.rel (%p2441) target = $region52
      $region51: #{basic_block_forward.1} parent=47 // pred_region
        %p2444 = scmp.lt.s32.totalorder %s17, 1
        %s2445 = scalar_select %p2444, %s17, 1
        %s2446 = smul.addr %s2445, 6
        %s2447 = smul.addr %s2446, 8
        %s2448 = scalar_lea.vmem %s5, %s2447
      $region52: #{basic_block_forward.1} parent=47 // pred_fallthru
        _
    $region48: #{basic_block_forward.1} parent=5 // pred_fallthru
      _
  $region6: #{basic_block_forward.1} parent=0 // loop_footer
    %s15 = sadd.s32 1, %s11
  $region7: #{basic_block_forward.1} parent=0 // loop_footer_branch
    %10 = sbr.rel target = $region3
  $region8: #{basic_block_forward.1} parent=0 // loop_exit
    _

</llo_original>
